<compile_context>
chip_gen: v7x
topology: tpu7x:2x2x1
jax: 0.10.0
libtpu: 0.0.40
codegen_flags: <defaults>
</compile_context>

<pallas_src>
import functools
import math

import jax
import jax.numpy as jnp
from jax.experimental import pallas as pl
from jax.experimental.pallas import tpu as pltpu


# -----------------------------------------------------------------------------
# Helpers
# -----------------------------------------------------------------------------
def _pick_tile(dim, target, align):
    """Largest `align`-aligned divisor of `dim` that is <= target, else full dim."""
    if dim <= target:
        return dim
    t = (target // align) * align
    while t >= align:
        if dim % t == 0:
            return t
        t -= align
    return dim  # no aligned divisor; fall back to the (always legal) full dim


# -----------------------------------------------------------------------------
# Kernel 1: tiled linear  y = x @ Wt + b
#   x:  (M, Hin)   (cast to bf16 in-kernel; already bf16 for the output proj)
#   Wt: (Hin, Hout) bf16  (pre-transposed in the wrapper -> plain MXU matmul)
#   b:  (1, Hout)  f32
# -----------------------------------------------------------------------------
def _linear_kernel(x_ref, wt_ref, b_ref, o_ref, acc_ref):
    @pl.when(pl.program_id(2) == 0)
    def _init():
        acc_ref[...] = jnp.zeros_like(acc_ref)

    acc_ref[...] += jnp.dot(
        x_ref[...].astype(jnp.bfloat16), wt_ref[...],
        preferred_element_type=jnp.float32)

    @pl.when(pl.program_id(2) == pl.num_programs(2) - 1)
    def _finalize():
        o_ref[...] = (acc_ref[...] + b_ref[...]).astype(o_ref.dtype)


def linear_pallas(x, wt, b, *, out_dtype, tm_target=256, tk_target=512):
    """x: (M, Hin), wt: (Hin, Hout) bf16, b: (Hout,) f32 -> (M, Hout) out_dtype."""
    M, Hin = x.shape
    Hout = wt.shape[1]
    tm = _pick_tile(M, tm_target, 16)      # multiple of 16 (bf16 sublane pairing)
    tn = _pick_tile(Hout, 2048, 128)       # full Hout whenever it is <= 2k
    tk = _pick_tile(Hin, tk_target, 128)
    grid = (M // tm, Hout // tn, Hin // tk)
    return pl.pallas_call(
        _linear_kernel,
        out_shape=jax.ShapeDtypeStruct((M, Hout), out_dtype),
        grid=grid,
        in_specs=[
            pl.BlockSpec((tm, tk), lambda i, j, kk: (i, kk)),
            pl.BlockSpec((tk, tn), lambda i, j, kk: (kk, j)),
            pl.BlockSpec((1, tn), lambda i, j, kk: (0, j)),
        ],
        out_specs=pl.BlockSpec((tm, tn), lambda i, j, kk: (i, j)),
        scratch_shapes=[pltpu.VMEM((tm, tn), jnp.float32)],
        compiler_params=pltpu.CompilerParams(
            dimension_semantics=("parallel", "parallel", "arbitrary"),
            vmem_limit_bytes=32 * 1024 * 1024,
        ),
    )(x, wt, b.reshape(1, Hout).astype(jnp.float32))


# -----------------------------------------------------------------------------
# Kernel 2: scaled dot-product attention, one (batch, q-tile) per grid step.
#   All heads handled inside the kernel; output is a lane-dense (tq, H) slab
#   laid out exactly like torch's transpose(1,2).contiguous().view(B, T, H).
# -----------------------------------------------------------------------------
def _attn_kernel(q_ref, kT_ref, v_ref, bias_ref, o_ref, *, head_num, dk):
    bias = bias_ref[...]                          # (1, T) f32 additive key-pad bias
    for h in range(head_num):                     # head_num is small & static
        lo = h * dk
        qh = q_ref[:, lo:lo + dk]                 # (tq, dk) bf16, 1/sqrt(dk) pre-folded
        khT = kT_ref[lo:lo + dk, :]               # (dk, T)  bf16, pre-transposed in HBM
        vh = v_ref[:, lo:lo + dk]                 # (T, dk)  bf16

        # scores + mask bias (f32 accumulation on the MXU)
        s = jnp.dot(qh, khT, preferred_element_type=jnp.float32) + bias   # (tq, T)

        # numerically stable softmax stats in f32; normalize AFTER the PV matmul
        m = jnp.max(s, axis=-1, keepdims=True)
        e = jnp.exp(s - m)                        # unnormalized probs in (0, 1]
        denom = jnp.sum(e, axis=-1, keepdims=True)

        oh = jnp.dot(e.astype(jnp.bfloat16), vh, preferred_element_type=jnp.float32)
        o_ref[:, lo:lo + dk] = (oh * pl.reciprocal(denom, approx=True)).astype(o_ref.dtype)


def attention_pallas(q, kT, v, bias, *, head_num, dk, tq_target=128):
    """q/v: (B, T, H) bf16 (heads in column blocks), kT: (B, H, T) bf16,
    bias: (B, 1, T) f32 additive key-padding bias."""
    B, T, H = q.shape
    tq = _pick_tile(T, tq_target, 16)
    kernel = functools.partial(_attn_kernel, head_num=head_num, dk=dk)
    return pl.pallas_call(
        kernel,
        out_shape=jax.ShapeDtypeStruct((B, T, H), jnp.bfloat16),
        grid=(B, T // tq),
        in_specs=[
            pl.BlockSpec((None, tq, H), lambda b, qi: (b, qi, 0)),
            pl.BlockSpec((None, H, T), lambda b, qi: (b, 0, 0)),
            pl.BlockSpec((None, T, H), lambda b, qi: (b, 0, 0)),
            pl.BlockSpec((None, 1, T), lambda b, qi: (b, 0, 0)),
        ],
        out_specs=pl.BlockSpec((None, tq, H), lambda b, qi: (b, qi, 0)),
        compiler_params=pltpu.CompilerParams(
            dimension_semantics=("parallel", "parallel"),
            vmem_limit_bytes=64 * 1024 * 1024,
        ),
    )(q, kT, v, bias)


# -----------------------------------------------------------------------------
# Module wrapper
# -----------------------------------------------------------------------------
def multihead_attn(params, query, key, value, mask=None, head_num=4):
    """query/key/value: (B, T, H) f32; mask: (B, T) key-padding mask or None."""
    B, T, H = query.shape
    assert H % head_num == 0
    dk = H // head_num
    (wq, bq), (wk, bk), (wv, bv), (wo, bo) = params   # torch (out, in) layout, f32

    # Fold 1/sqrt(dk) into the Q projection; pre-transpose every weight once to
    # (Hin, Hout) bf16 so all kernel matmuls are plain (M,K)x(K,N) MXU ops.
    scale = 1.0 / math.sqrt(dk)
    wqT = (wq * scale).T.astype(jnp.bfloat16)
    wkT = wk.T.astype(jnp.bfloat16)
    wvT = wv.T.astype(jnp.bfloat16)
    woT = wo.T.astype(jnp.bfloat16)
    bq_s = bq * scale

    xq = query.reshape(B * T, H)
    if (query is key) and (key is value):
        # Self-attention fast path: single fused QKV projection (no activation restream).
        w_qkvT = jnp.concatenate([wqT, wkT, wvT], axis=1)            # (H, 3H) bf16
        b_qkv = jnp.concatenate([bq_s, bk, bv], axis=0)              # (3H,)
        qkv = linear_pallas(xq, w_qkvT, b_qkv, out_dtype=jnp.bfloat16)  # (B*T, 3H)
        q = qkv[:, :H].reshape(B, T, H)
        k = qkv[:, H:2 * H].reshape(B, T, H)
        v = qkv[:, 2 * H:].reshape(B, T, H)
    else:
        q = linear_pallas(xq, wqT, bq_s, out_dtype=jnp.bfloat16).reshape(B, T, H)
        k = linear_pallas(key.reshape(B * T, H), wkT, bk,
                          out_dtype=jnp.bfloat16).reshape(B, T, H)
        v = linear_pallas(value.reshape(B * T, H), wvT, bv,
                          out_dtype=jnp.bfloat16).reshape(B, T, H)

    # One cheap HBM-side transpose of K (bf16) replaces per-head, per-q-tile
    # in-VMEM transposes inside the attention kernel.
    kT = jnp.swapaxes(k, 1, 2)                                       # (B, H, T) bf16

    # Key-padding mask as an additive bias: 0 keep / -1e8 drop (== masked_fill after exp).
    if mask is None:
        bias = jnp.zeros((B, 1, T), jnp.float32)
    else:
        bias = (mask.astype(jnp.float32).reshape(B, 1, T) - 1.0) * 1.0e8

    heads = attention_pallas(q, kT, v, bias, head_num=head_num, dk=dk)  # (B,T,H) bf16

    out = linear_pallas(heads.reshape(B * T, H), woT, bo, out_dtype=jnp.float32)
    return out.reshape(B, T, H)


def init_params(key, hidden_size):
    """Four Linear(hidden, hidden) layers (torch (out,in) layout), deterministic init."""
    params = []
    bound = 1.0 / math.sqrt(hidden_size)
    for i in range(4):
        kw, kb, key = jax.random.split(jax.random.fold_in(key, i), 3)
        w = jax.random.uniform(kw, (hidden_size, hidden_size), jnp.float32, -bound, bound)
        b = jax.random.uniform(kb, (hidden_size,), jnp.float32, -bound, bound)
        params.append((w, b))
    return params


# -----------------------------------------------------------------------------
# Pure-JAX reference (mirrors the torch module in f32) for a tolerance check.
# -----------------------------------------------------------------------------
def _reference_mha(params, query, key, value, mask, head_num):
    (wq, bq), (wk, bk), (wv, bv), (wo, bo) = params
    B, T, H = query.shape
    dk = H // head_num

    def lin(x, w, b):
        return x @ w.T + b

    def split(x):
        return x.reshape(B, T, head_num, dk).transpose(0, 2, 1, 3)

    q, k, v = split(lin(query, wq, bq)), split(lin(key, wk, bk)), split(lin(value, wv, bv))
    s = jnp.einsum("bhqd,bhkd->bhqk", q, k) / math.sqrt(dk)
    if mask is not None:
        s = jnp.where(mask[:, None, None, :] == 0, -1.0e8, s)
    p = jax.nn.softmax(s, axis=-1)
    o = jnp.einsum("bhqk,bhkd->bhqd", p, v).transpose(0, 2, 1, 3).reshape(B, T, H)
    return o @ wo.T + bo


if __name__ == "__main__":
    B, T = 2, 8
    hidden_size = 32
    head_num = 4

    root = jax.random.PRNGKey(0)
    kq, kk, kv, kp = jax.random.split(root, 4)

    query = jax.random.normal(kq, (B, T, hidden_size), jnp.float32)
    key_in = jax.random.normal(kk, (B, T, hidden_size), jnp.float32)
    value = jax.random.normal(kv, (B, T, hidden_size), jnp.float32)

    # key-padding mask: (B, T), last two key positions masked out
    mask = jnp.ones((B, T), jnp.int32).at[:, T - 2:].set(0)

    params = init_params(kp, hidden_size)

    # Cross-attention path (three separate projections).
    fwd = jax.jit(functools.partial(multihead_attn, head_num=head_num))
    out = jax.block_until_ready(fwd(params, query, key_in, value, mask))
    assert out.shape == (B, T, hidden_size)
    assert bool(jnp.all(jnp.isfinite(out)))
    ref = _reference_mha(params, query, key_in, value, mask, head_num)
    assert float(jnp.max(jnp.abs(out - ref))) < 0.15  # bf16 chain tolerance

    # Self-attention path (fused QKV projection).
    self_fwd = jax.jit(
        lambda p, x, m: multihead_attn(p, x, x, x, m, head_num=head_num))
    out_self = jax.block_until_ready(self_fwd(params, query, mask))
    assert out_self.shape == (B, T, hidden_size)
    assert bool(jnp.all(jnp.isfinite(out_self)))
    ref_self = _reference_mha(params, query, query, query, mask, head_num)
    assert float(jnp.max(jnp.abs(out_self - ref_self))) < 0.15

    print("KERNEL_OK")
</pallas_src>

<mosaic_0001>
module attributes {stable_mosaic.version = 11 : i64} {
  func.func @_linear_kernel(%arg0: i32, %arg1: i32, %arg2: i32, %arg3: memref<16x32xf32, #tpu.memory_space<vmem>>, %arg4: memref<32x32xbf16, #tpu.memory_space<vmem>>, %arg5: memref<1x32xf32, #tpu.memory_space<vmem>>, %arg6: memref<16x32xbf16, #tpu.memory_space<vmem>>, %arg7: memref<16x32xf32, #tpu.memory_space<vmem>>) attributes {dimension_semantics = [#tpu.dimension_semantics<parallel>, #tpu.dimension_semantics<parallel>, #tpu.dimension_semantics<arbitrary>], iteration_bounds = array<i64: 1, 1, 1>, scalar_prefetch = 0 : i64, scratch_operands = 1 : i64, tpu.core_type = #tpu.core_type<tc>, window_params = [{transform_indices = @transform_0, window_bounds = array<i64: 16, 32>}, {transform_indices = @transform_1, window_bounds = array<i64: 32, 32>}, {transform_indices = @transform_2, window_bounds = array<i64: 1, 32>}, {transform_indices = @transform_3, window_bounds = array<i64: 16, 32>}]} {
    %c0_i32 = arith.constant 0 : i32
    %0 = arith.cmpi eq, %arg2, %c0_i32 : i32
    %1 = arith.extui %0 : i1 to i32
    %c0_i32_0 = arith.constant 0 : i32
    %2 = arith.cmpi ne, %1, %c0_i32_0 : i32
    scf.if %2 {
      %cst_10 = arith.constant 0.000000e+00 : f32
      %13 = vector.broadcast %cst_10 : f32 to vector<16x32xf32>
      %c0_11 = arith.constant 0 : index
      %c0_12 = arith.constant 0 : index
      %14 = vector.load %arg7[%c0_11, %c0_12] : memref<16x32xf32, #tpu.memory_space<vmem>>, vector<16x32xf32>
      tpu.vector_store %arg7[%c0_11, %c0_12], %13 {strides = array<i32>} : memref<16x32xf32, #tpu.memory_space<vmem>>, vector<16x32xf32>,
    } else {
    }
    %c0 = arith.constant 0 : index
    %c0_1 = arith.constant 0 : index
    %3 = vector.load %arg7[%c0, %c0_1] : memref<16x32xf32, #tpu.memory_space<vmem>>, vector<16x32xf32>
    %c0_2 = arith.constant 0 : index
    %c0_3 = arith.constant 0 : index
    %4 = vector.load %arg3[%c0_2, %c0_3] : memref<16x32xf32, #tpu.memory_space<vmem>>, vector<16x32xf32>
    %5 = arith.truncf %4 : vector<16x32xf32> to vector<16x32xbf16>
    %c0_4 = arith.constant 0 : index
    %c0_5 = arith.constant 0 : index
    %6 = vector.load %arg4[%c0_4, %c0_5] : memref<32x32xbf16, #tpu.memory_space<vmem>>, vector<32x32xbf16>
    %cst = arith.constant dense<0.000000e+00> : vector<16x32xf32>
    %7 = tpu.matmul %5, %6, %cst {dimension_numbers = #tpu.dot_dimension_numbers<[1], [0], [0], [1], [0, 0, 1, 1], [], []>} : vector<16x32xbf16>, vector<32x32xbf16>, vector<16x32xf32> -> vector<16x32xf32>
    %8 = arith.addf %3, %7 : vector<16x32xf32>
    %c0_6 = arith.constant 0 : index
    %c0_7 = arith.constant 0 : index
    %9 = vector.load %arg7[%c0_6, %c0_7] : memref<16x32xf32, #tpu.memory_space<vmem>>, vector<16x32xf32>
    tpu.vector_store %arg7[%c0_6, %c0_7], %8 {strides = array<i32>} : memref<16x32xf32, #tpu.memory_space<vmem>>, vector<16x32xf32>,
    %c0_i32_8 = arith.constant 0 : i32
    %10 = arith.cmpi eq, %arg2, %c0_i32_8 : i32
    %11 = arith.extui %10 : i1 to i32
    %c0_i32_9 = arith.constant 0 : i32
    %12 = arith.cmpi ne, %11, %c0_i32_9 : i32
    scf.if %12 {
      %c0_10 = arith.constant 0 : index
      %c0_11 = arith.constant 0 : index
      %13 = vector.load %arg7[%c0_10, %c0_11] : memref<16x32xf32, #tpu.memory_space<vmem>>, vector<16x32xf32>
      %c0_12 = arith.constant 0 : index
      %c0_13 = arith.constant 0 : index
      %14 = vector.load %arg5[%c0_12, %c0_13] : memref<1x32xf32, #tpu.memory_space<vmem>>, vector<1x32xf32>
      %15 = vector.broadcast %14 : vector<1x32xf32> to vector<16x32xf32>
      %16 = arith.addf %13, %15 : vector<16x32xf32>
      %17 = arith.truncf %16 : vector<16x32xf32> to vector<16x32xbf16>
      %c0_14 = arith.constant 0 : index
      %c0_15 = arith.constant 0 : index
      %18 = vector.load %arg6[%c0_14, %c0_15] : memref<16x32xbf16, #tpu.memory_space<vmem>>, vector<16x32xbf16>
      tpu.vector_store %arg6[%c0_14, %c0_15], %17 {strides = array<i32>} : memref<16x32xbf16, #tpu.memory_space<vmem>>, vector<16x32xbf16>,
    } else {
    }
    return
  }
  func.func @transform_0(%arg0: i32, %arg1: i32, %arg2: i32) -> (i32, i32) {
    %c0_i32 = arith.constant 0 : i32
    return %arg0, %arg2 : i32, i32
  }
  func.func @transform_1(%arg0: i32, %arg1: i32, %arg2: i32) -> (i32, i32) {
    %c0_i32 = arith.constant 0 : i32
    return %arg2, %arg1 : i32, i32
  }
  func.func @transform_2(%arg0: i32, %arg1: i32, %arg2: i32) -> (i32, i32) {
    %c0_i32 = arith.constant 0 : i32
    %c0_i32_0 = arith.constant 0 : i32
    return %c0_i32, %arg1 : i32, i32
  }
  func.func @transform_3(%arg0: i32, %arg1: i32, %arg2: i32) -> (i32, i32) {
    %c0_i32 = arith.constant 0 : i32
    return %arg0, %arg1 : i32, i32
  }
}

module attributes {stable_mosaic.version = 11 : i64} {
  func.func @_attn_kernel(%arg0: i32, %arg1: i32, %arg2: memref<1x8x32xbf16, #tpu.memory_space<vmem>>, %arg3: memref<1x32x8xbf16, #tpu.memory_space<vmem>>, %arg4: memref<1x8x32xbf16, #tpu.memory_space<vmem>>, %arg5: memref<1x1x8xf32, #tpu.memory_space<vmem>>, %arg6: memref<1x8x32xbf16, #tpu.memory_space<vmem>>) attributes {dimension_semantics = [#tpu.dimension_semantics<parallel>, #tpu.dimension_semantics<parallel>], iteration_bounds = array<i64: 2, 1>, scalar_prefetch = 0 : i64, scratch_operands = 0 : i64, tpu.core_type = #tpu.core_type<tc>, window_params = [{transform_indices = @transform_0, window_bounds = array<i64: 1, 8, 32>}, {transform_indices = @transform_1, window_bounds = array<i64: 1, 32, 8>}, {transform_indices = @transform_2, window_bounds = array<i64: 1, 8, 32>}, {transform_indices = @transform_3, window_bounds = array<i64: 1, 1, 8>}, {transform_indices = @transform_4, window_bounds = array<i64: 1, 8, 32>}]} {
    %c0 = arith.constant 0 : index
    %c0_0 = arith.constant 0 : index
    %c0_1 = arith.constant 0 : index
    %0 = vector.load %arg5[%c0, %c0_0, %c0_1] : memref<1x1x8xf32, #tpu.memory_space<vmem>>, vector<1x1x8xf32>
    %1 = vector.shape_cast %0 : vector<1x1x8xf32> to vector<1x8xf32>
    %c0_2 = arith.constant 0 : index
    %c0_3 = arith.constant 0 : index
    %c0_4 = arith.constant 0 : index
    %2 = vector.load %arg2[%c0_2, %c0_3, %c0_4] : memref<1x8x32xbf16, #tpu.memory_space<vmem>>, vector<1x8x8xbf16>
    %3 = vector.shape_cast %2 : vector<1x8x8xbf16> to vector<8x8xbf16>
    %c0_5 = arith.constant 0 : index
    %c0_6 = arith.constant 0 : index
    %c0_7 = arith.constant 0 : index
    %4 = vector.load %arg3[%c0_5, %c0_6, %c0_7] : memref<1x32x8xbf16, #tpu.memory_space<vmem>>, vector<1x8x8xbf16>
    %5 = vector.shape_cast %4 : vector<1x8x8xbf16> to vector<8x8xbf16>
    %c0_8 = arith.constant 0 : index
    %c0_9 = arith.constant 0 : index
    %c0_10 = arith.constant 0 : index
    %6 = vector.load %arg4[%c0_8, %c0_9, %c0_10] : memref<1x8x32xbf16, #tpu.memory_space<vmem>>, vector<1x8x8xbf16>
    %7 = vector.shape_cast %6 : vector<1x8x8xbf16> to vector<8x8xbf16>
    %cst = arith.constant dense<0.000000e+00> : vector<8x8xf32>
    %8 = tpu.matmul %3, %5, %cst {dimension_numbers = #tpu.dot_dimension_numbers<[1], [0], [0], [1], [0, 0, 1, 1], [], []>} : vector<8x8xbf16>, vector<8x8xbf16>, vector<8x8xf32> -> vector<8x8xf32>
    %9 = vector.broadcast %1 : vector<1x8xf32> to vector<8x8xf32>
    %10 = arith.addf %8, %9 : vector<8x8xf32>
    %cst_11 = arith.constant dense<0xFF800000> : vector<8xf32>
    %11 = vector.multi_reduction <maximumf>, %10, %cst_11 [1] : vector<8x8xf32> to vector<8xf32>
    %12 = vector.shape_cast %11 : vector<8xf32> to vector<8x1xf32>
    %13 = vector.broadcast %12 : vector<8x1xf32> to vector<8x8xf32>
    %14 = arith.subf %10, %13 : vector<8x8xf32>
    %15 = math.exp %14 : vector<8x8xf32>
    %cst_12 = arith.constant dense<0.000000e+00> : vector<8xf32>
    %16 = vector.multi_reduction <add>, %15, %cst_12 [1] : vector<8x8xf32> to vector<8xf32>
    %17 = vector.shape_cast %16 : vector<8xf32> to vector<8x1xf32>
    %18 = arith.truncf %15 : vector<8x8xf32> to vector<8x8xbf16>
    %cst_13 = arith.constant dense<0.000000e+00> : vector<8x8xf32>
    %19 = tpu.matmul %18, %7, %cst_13 {dimension_numbers = #tpu.dot_dimension_numbers<[1], [0], [0], [1], [0, 0, 1, 1], [], []>} : vector<8x8xbf16>, vector<8x8xbf16>, vector<8x8xf32> -> vector<8x8xf32>
    %20 = tpu.reciprocal %17 {approx = true} : vector<8x1xf32> -> vector<8x1xf32>
    %21 = vector.broadcast %20 : vector<8x1xf32> to vector<8x8xf32>
    %22 = arith.mulf %19, %21 : vector<8x8xf32>
    %23 = arith.truncf %22 : vector<8x8xf32> to vector<8x8xbf16>
    %c0_14 = arith.constant 0 : index
    %c0_15 = arith.constant 0 : index
    %c0_16 = arith.constant 0 : index
    %24 = vector.load %arg6[%c0_14, %c0_15, %c0_16] : memref<1x8x32xbf16, #tpu.memory_space<vmem>>, vector<1x8x8xbf16>
    %25 = vector.shape_cast %24 : vector<1x8x8xbf16> to vector<8x8xbf16>
    %26 = vector.shape_cast %23 : vector<8x8xbf16> to vector<1x8x8xbf16>
    tpu.vector_store %arg6[%c0_14, %c0_15, %c0_16], %26 {strides = array<i32>} : memref<1x8x32xbf16, #tpu.memory_space<vmem>>, vector<1x8x8xbf16>,
    %c0_17 = arith.constant 0 : index
    %c0_18 = arith.constant 0 : index
    %c8 = arith.constant 8 : index
    %27 = vector.load %arg2[%c0_17, %c0_18, %c8] : memref<1x8x32xbf16, #tpu.memory_space<vmem>>, vector<1x8x8xbf16>
    %28 = vector.shape_cast %27 : vector<1x8x8xbf16> to vector<8x8xbf16>
    %c0_19 = arith.constant 0 : index
    %c8_20 = arith.constant 8 : index
    %c0_21 = arith.constant 0 : index
    %29 = vector.load %arg3[%c0_19, %c8_20, %c0_21] : memref<1x32x8xbf16, #tpu.memory_space<vmem>>, vector<1x8x8xbf16>
    %30 = vector.shape_cast %29 : vector<1x8x8xbf16> to vector<8x8xbf16>
    %c0_22 = arith.constant 0 : index
    %c0_23 = arith.constant 0 : index
    %c8_24 = arith.constant 8 : index
    %31 = vector.load %arg4[%c0_22, %c0_23, %c8_24] : memref<1x8x32xbf16, #tpu.memory_space<vmem>>, vector<1x8x8xbf16>
    %32 = vector.shape_cast %31 : vector<1x8x8xbf16> to vector<8x8xbf16>
    %cst_25 = arith.constant dense<0.000000e+00> : vector<8x8xf32>
    %33 = tpu.matmul %28, %30, %cst_25 {dimension_numbers = #tpu.dot_dimension_numbers<[1], [0], [0], [1], [0, 0, 1, 1], [], []>} : vector<8x8xbf16>, vector<8x8xbf16>, vector<8x8xf32> -> vector<8x8xf32>
    %34 = vector.broadcast %1 : vector<1x8xf32> to vector<8x8xf32>
    %35 = arith.addf %33, %34 : vector<8x8xf32>
    %cst_26 = arith.constant dense<0xFF800000> : vector<8xf32>
    %36 = vector.multi_reduction <maximumf>, %35, %cst_26 [1] : vector<8x8xf32> to vector<8xf32>
    %37 = vector.shape_cast %36 : vector<8xf32> to vector<8x1xf32>
    %38 = vector.broadcast %37 : vector<8x1xf32> to vector<8x8xf32>
    %39 = arith.subf %35, %38 : vector<8x8xf32>
    %40 = math.exp %39 : vector<8x8xf32>
    %cst_27 = arith.constant dense<0.000000e+00> : vector<8xf32>
    %41 = vector.multi_reduction <add>, %40, %cst_27 [1] : vector<8x8xf32> to vector<8xf32>
    %42 = vector.shape_cast %41 : vector<8xf32> to vector<8x1xf32>
    %43 = arith.truncf %40 : vector<8x8xf32> to vector<8x8xbf16>
    %cst_28 = arith.constant dense<0.000000e+00> : vector<8x8xf32>
    %44 = tpu.matmul %43, %32, %cst_28 {dimension_numbers = #tpu.dot_dimension_numbers<[1], [0], [0], [1], [0, 0, 1, 1], [], []>} : vector<8x8xbf16>, vector<8x8xbf16>, vector<8x8xf32> -> vector<8x8xf32>
    %45 = tpu.reciprocal %42 {approx = true} : vector<8x1xf32> -> vector<8x1xf32>
    %46 = vector.broadcast %45 : vector<8x1xf32> to vector<8x8xf32>
    %47 = arith.mulf %44, %46 : vector<8x8xf32>
    %48 = arith.truncf %47 : vector<8x8xf32> to vector<8x8xbf16>
    %c0_29 = arith.constant 0 : index
    %c0_30 = arith.constant 0 : index
    %c8_31 = arith.constant 8 : index
    %49 = vector.load %arg6[%c0_29, %c0_30, %c8_31] : memref<1x8x32xbf16, #tpu.memory_space<vmem>>, vector<1x8x8xbf16>
    %50 = vector.shape_cast %49 : vector<1x8x8xbf16> to vector<8x8xbf16>
    %51 = vector.shape_cast %48 : vector<8x8xbf16> to vector<1x8x8xbf16>
    tpu.vector_store %arg6[%c0_29, %c0_30, %c8_31], %51 {strides = array<i32>} : memref<1x8x32xbf16, #tpu.memory_space<vmem>>, vector<1x8x8xbf16>,
    %c0_32 = arith.constant 0 : index
    %c0_33 = arith.constant 0 : index
    %c16 = arith.constant 16 : index
    %52 = vector.load %arg2[%c0_32, %c0_33, %c16] : memref<1x8x32xbf16, #tpu.memory_space<vmem>>, vector<1x8x8xbf16>
    %53 = vector.shape_cast %52 : vector<1x8x8xbf16> to vector<8x8xbf16>
    %c0_34 = arith.constant 0 : index
    %c16_35 = arith.constant 16 : index
    %c0_36 = arith.constant 0 : index
    %54 = vector.load %arg3[%c0_34, %c16_35, %c0_36] : memref<1x32x8xbf16, #tpu.memory_space<vmem>>, vector<1x8x8xbf16>
    %55 = vector.shape_cast %54 : vector<1x8x8xbf16> to vector<8x8xbf16>
    %c0_37 = arith.constant 0 : index
    %c0_38 = arith.constant 0 : index
    %c16_39 = arith.constant 16 : index
    %56 = vector.load %arg4[%c0_37, %c0_38, %c16_39] : memref<1x8x32xbf16, #tpu.memory_space<vmem>>, vector<1x8x8xbf16>
    %57 = vector.shape_cast %56 : vector<1x8x8xbf16> to vector<8x8xbf16>
    %cst_40 = arith.constant dense<0.000000e+00> : vector<8x8xf32>
    %58 = tpu.matmul %53, %55, %cst_40 {dimension_numbers = #tpu.dot_dimension_numbers<[1], [0], [0], [1], [0, 0, 1, 1], [], []>} : vector<8x8xbf16>, vector<8x8xbf16>, vector<8x8xf32> -> vector<8x8xf32>
    %59 = vector.broadcast %1 : vector<1x8xf32> to vector<8x8xf32>
    %60 = arith.addf %58, %59 : vector<8x8xf32>
    %cst_41 = arith.constant dense<0xFF800000> : vector<8xf32>
    %61 = vector.multi_reduction <maximumf>, %60, %cst_41 [1] : vector<8x8xf32> to vector<8xf32>
    %62 = vector.shape_cast %61 : vector<8xf32> to vector<8x1xf32>
    %63 = vector.broadcast %62 : vector<8x1xf32> to vector<8x8xf32>
    %64 = arith.subf %60, %63 : vector<8x8xf32>
    %65 = math.exp %64 : vector<8x8xf32>
    %cst_42 = arith.constant dense<0.000000e+00> : vector<8xf32>
    %66 = vector.multi_reduction <add>, %65, %cst_42 [1] : vector<8x8xf32> to vector<8xf32>
    %67 = vector.shape_cast %66 : vector<8xf32> to vector<8x1xf32>
    %68 = arith.truncf %65 : vector<8x8xf32> to vector<8x8xbf16>
    %cst_43 = arith.constant dense<0.000000e+00> : vector<8x8xf32>
    %69 = tpu.matmul %68, %57, %cst_43 {dimension_numbers = #tpu.dot_dimension_numbers<[1], [0], [0], [1], [0, 0, 1, 1], [], []>} : vector<8x8xbf16>, vector<8x8xbf16>, vector<8x8xf32> -> vector<8x8xf32>
    %70 = tpu.reciprocal %67 {approx = true} : vector<8x1xf32> -> vector<8x1xf32>
    %71 = vector.broadcast %70 : vector<8x1xf32> to vector<8x8xf32>
    %72 = arith.mulf %69, %71 : vector<8x8xf32>
    %73 = arith.truncf %72 : vector<8x8xf32> to vector<8x8xbf16>
    %c0_44 = arith.constant 0 : index
    %c0_45 = arith.constant 0 : index
    %c16_46 = arith.constant 16 : index
    %74 = vector.load %arg6[%c0_44, %c0_45, %c16_46] : memref<1x8x32xbf16, #tpu.memory_space<vmem>>, vector<1x8x8xbf16>
    %75 = vector.shape_cast %74 : vector<1x8x8xbf16> to vector<8x8xbf16>
    %76 = vector.shape_cast %73 : vector<8x8xbf16> to vector<1x8x8xbf16>
    tpu.vector_store %arg6[%c0_44, %c0_45, %c16_46], %76 {strides = array<i32>} : memref<1x8x32xbf16, #tpu.memory_space<vmem>>, vector<1x8x8xbf16>,
    %c0_47 = arith.constant 0 : index
    %c0_48 = arith.constant 0 : index
    %c24 = arith.constant 24 : index
    %77 = vector.load %arg2[%c0_47, %c0_48, %c24] : memref<1x8x32xbf16, #tpu.memory_space<vmem>>, vector<1x8x8xbf16>
    %78 = vector.shape_cast %77 : vector<1x8x8xbf16> to vector<8x8xbf16>
    %c0_49 = arith.constant 0 : index
    %c24_50 = arith.constant 24 : index
    %c0_51 = arith.constant 0 : index
    %79 = vector.load %arg3[%c0_49, %c24_50, %c0_51] : memref<1x32x8xbf16, #tpu.memory_space<vmem>>, vector<1x8x8xbf16>
    %80 = vector.shape_cast %79 : vector<1x8x8xbf16> to vector<8x8xbf16>
    %c0_52 = arith.constant 0 : index
    %c0_53 = arith.constant 0 : index
    %c24_54 = arith.constant 24 : index
    %81 = vector.load %arg4[%c0_52, %c0_53, %c24_54] : memref<1x8x32xbf16, #tpu.memory_space<vmem>>, vector<1x8x8xbf16>
    %82 = vector.shape_cast %81 : vector<1x8x8xbf16> to vector<8x8xbf16>
    %cst_55 = arith.constant dense<0.000000e+00> : vector<8x8xf32>
    %83 = tpu.matmul %78, %80, %cst_55 {dimension_numbers = #tpu.dot_dimension_numbers<[1], [0], [0], [1], [0, 0, 1, 1], [], []>} : vector<8x8xbf16>, vector<8x8xbf16>, vector<8x8xf32> -> vector<8x8xf32>
    %84 = vector.broadcast %1 : vector<1x8xf32> to vector<8x8xf32>
    %85 = arith.addf %83, %84 : vector<8x8xf32>
    %cst_56 = arith.constant dense<0xFF800000> : vector<8xf32>
    %86 = vector.multi_reduction <maximumf>, %85, %cst_56 [1] : vector<8x8xf32> to vector<8xf32>
    %87 = vector.shape_cast %86 : vector<8xf32> to vector<8x1xf32>
    %88 = vector.broadcast %87 : vector<8x1xf32> to vector<8x8xf32>
    %89 = arith.subf %85, %88 : vector<8x8xf32>
    %90 = math.exp %89 : vector<8x8xf32>
    %cst_57 = arith.constant dense<0.000000e+00> : vector<8xf32>
    %91 = vector.multi_reduction <add>, %90, %cst_57 [1] : vector<8x8xf32> to vector<8xf32>
    %92 = vector.shape_cast %91 : vector<8xf32> to vector<8x1xf32>
    %93 = arith.truncf %90 : vector<8x8xf32> to vector<8x8xbf16>
    %cst_58 = arith.constant dense<0.000000e+00> : vector<8x8xf32>
    %94 = tpu.matmul %93, %82, %cst_58 {dimension_numbers = #tpu.dot_dimension_numbers<[1], [0], [0], [1], [0, 0, 1, 1], [], []>} : vector<8x8xbf16>, vector<8x8xbf16>, vector<8x8xf32> -> vector<8x8xf32>
    %95 = tpu.reciprocal %92 {approx = true} : vector<8x1xf32> -> vector<8x1xf32>
    %96 = vector.broadcast %95 : vector<8x1xf32> to vector<8x8xf32>
    %97 = arith.mulf %94, %96 : vector<8x8xf32>
    %98 = arith.truncf %97 : vector<8x8xf32> to vector<8x8xbf16>
    %c0_59 = arith.constant 0 : index
    %c0_60 = arith.constant 0 : index
    %c24_61 = arith.constant 24 : index
    %99 = vector.load %arg6[%c0_59, %c0_60, %c24_61] : memref<1x8x32xbf16, #tpu.memory_space<vmem>>, vector<1x8x8xbf16>
    %100 = vector.shape_cast %99 : vector<1x8x8xbf16> to vector<8x8xbf16>
    %101 = vector.shape_cast %98 : vector<8x8xbf16> to vector<1x8x8xbf16>
    tpu.vector_store %arg6[%c0_59, %c0_60, %c24_61], %101 {strides = array<i32>} : memref<1x8x32xbf16, #tpu.memory_space<vmem>>, vector<1x8x8xbf16>,
    return
  }
  func.func @transform_0(%arg0: i32, %arg1: i32) -> (i32, i32, i32) {
    %c0_i32 = arith.constant 0 : i32
    %c0_i32_0 = arith.constant 0 : i32
    return %arg0, %arg1, %c0_i32 : i32, i32, i32
  }
  func.func @transform_1(%arg0: i32, %arg1: i32) -> (i32, i32, i32) {
    %c0_i32 = arith.constant 0 : i32
    %c0_i32_0 = arith.constant 0 : i32
    %c0_i32_1 = arith.constant 0 : i32
    return %arg0, %c0_i32, %c0_i32_0 : i32, i32, i32
  }
  func.func @transform_2(%arg0: i32, %arg1: i32) -> (i32, i32, i32) {
    %c0_i32 = arith.constant 0 : i32
    %c0_i32_0 = arith.constant 0 : i32
    %c0_i32_1 = arith.constant 0 : i32
    return %arg0, %c0_i32, %c0_i32_0 : i32, i32, i32
  }
  func.func @transform_3(%arg0: i32, %arg1: i32) -> (i32, i32, i32) {
    %c0_i32 = arith.constant 0 : i32
    %c0_i32_0 = arith.constant 0 : i32
    %c0_i32_1 = arith.constant 0 : i32
    return %arg0, %c0_i32, %c0_i32_0 : i32, i32, i32
  }
  func.func @transform_4(%arg0: i32, %arg1: i32) -> (i32, i32, i32) {
    %c0_i32 = arith.constant 0 : i32
    %c0_i32_0 = arith.constant 0 : i32
    return %arg0, %arg1, %c0_i32 : i32, i32, i32
  }
}

module attributes {stable_mosaic.version = 11 : i64} {
  func.func @_linear_kernel(%arg0: i32, %arg1: i32, %arg2: i32, %arg3: memref<16x32xbf16, #tpu.memory_space<vmem>>, %arg4: memref<32x32xbf16, #tpu.memory_space<vmem>>, %arg5: memref<1x32xf32, #tpu.memory_space<vmem>>, %arg6: memref<16x32xf32, #tpu.memory_space<vmem>>, %arg7: memref<16x32xf32, #tpu.memory_space<vmem>>) attributes {dimension_semantics = [#tpu.dimension_semantics<parallel>, #tpu.dimension_semantics<parallel>, #tpu.dimension_semantics<arbitrary>], iteration_bounds = array<i64: 1, 1, 1>, scalar_prefetch = 0 : i64, scratch_operands = 1 : i64, tpu.core_type = #tpu.core_type<tc>, window_params = [{transform_indices = @transform_0, window_bounds = array<i64: 16, 32>}, {transform_indices = @transform_1, window_bounds = array<i64: 32, 32>}, {transform_indices = @transform_2, window_bounds = array<i64: 1, 32>}, {transform_indices = @transform_3, window_bounds = array<i64: 16, 32>}]} {
    %c0_i32 = arith.constant 0 : i32
    %0 = arith.cmpi eq, %arg2, %c0_i32 : i32
    %1 = arith.extui %0 : i1 to i32
    %c0_i32_0 = arith.constant 0 : i32
    %2 = arith.cmpi ne, %1, %c0_i32_0 : i32
    scf.if %2 {
      %cst_10 = arith.constant 0.000000e+00 : f32
      %12 = vector.broadcast %cst_10 : f32 to vector<16x32xf32>
      %c0_11 = arith.constant 0 : index
      %c0_12 = arith.constant 0 : index
      %13 = vector.load %arg7[%c0_11, %c0_12] : memref<16x32xf32, #tpu.memory_space<vmem>>, vector<16x32xf32>
      tpu.vector_store %arg7[%c0_11, %c0_12], %12 {strides = array<i32>} : memref<16x32xf32, #tpu.memory_space<vmem>>, vector<16x32xf32>,
    } else {
    }
    %c0 = arith.constant 0 : index
    %c0_1 = arith.constant 0 : index
    %3 = vector.load %arg7[%c0, %c0_1] : memref<16x32xf32, #tpu.memory_space<vmem>>, vector<16x32xf32>
    %c0_2 = arith.constant 0 : index
    %c0_3 = arith.constant 0 : index
    %4 = vector.load %arg3[%c0_2, %c0_3] : memref<16x32xbf16, #tpu.memory_space<vmem>>, vector<16x32xbf16>
    %c0_4 = arith.constant 0 : index
    %c0_5 = arith.constant 0 : index
    %5 = vector.load %arg4[%c0_4, %c0_5] : memref<32x32xbf16, #tpu.memory_space<vmem>>, vector<32x32xbf16>
    %cst = arith.constant dense<0.000000e+00> : vector<16x32xf32>
    %6 = tpu.matmul %4, %5, %cst {dimension_numbers = #tpu.dot_dimension_numbers<[1], [0], [0], [1], [0, 0, 1, 1], [], []>} : vector<16x32xbf16>, vector<32x32xbf16>, vector<16x32xf32> -> vector<16x32xf32>
    %7 = arith.addf %3, %6 : vector<16x32xf32>
    %c0_6 = arith.constant 0 : index
    %c0_7 = arith.constant 0 : index
    %8 = vector.load %arg7[%c0_6, %c0_7] : memref<16x32xf32, #tpu.memory_space<vmem>>, vector<16x32xf32>
    tpu.vector_store %arg7[%c0_6, %c0_7], %7 {strides = array<i32>} : memref<16x32xf32, #tpu.memory_space<vmem>>, vector<16x32xf32>,
    %c0_i32_8 = arith.constant 0 : i32
    %9 = arith.cmpi eq, %arg2, %c0_i32_8 : i32
    %10 = arith.extui %9 : i1 to i32
    %c0_i32_9 = arith.constant 0 : i32
    %11 = arith.cmpi ne, %10, %c0_i32_9 : i32
    scf.if %11 {
      %c0_10 = arith.constant 0 : index
      %c0_11 = arith.constant 0 : index
      %12 = vector.load %arg7[%c0_10, %c0_11] : memref<16x32xf32, #tpu.memory_space<vmem>>, vector<16x32xf32>
      %c0_12 = arith.constant 0 : index
      %c0_13 = arith.constant 0 : index
      %13 = vector.load %arg5[%c0_12, %c0_13] : memref<1x32xf32, #tpu.memory_space<vmem>>, vector<1x32xf32>
      %14 = vector.broadcast %13 : vector<1x32xf32> to vector<16x32xf32>
      %15 = arith.addf %12, %14 : vector<16x32xf32>
      %c0_14 = arith.constant 0 : index
      %c0_15 = arith.constant 0 : index
      %16 = vector.load %arg6[%c0_14, %c0_15] : memref<16x32xf32, #tpu.memory_space<vmem>>, vector<16x32xf32>
      tpu.vector_store %arg6[%c0_14, %c0_15], %15 {strides = array<i32>} : memref<16x32xf32, #tpu.memory_space<vmem>>, vector<16x32xf32>,
    } else {
    }
    return
  }
  func.func @transform_0(%arg0: i32, %arg1: i32, %arg2: i32) -> (i32, i32) {
    %c0_i32 = arith.constant 0 : i32
    return %arg0, %arg2 : i32, i32
  }
  func.func @transform_1(%arg0: i32, %arg1: i32, %arg2: i32) -> (i32, i32) {
    %c0_i32 = arith.constant 0 : i32
    return %arg2, %arg1 : i32, i32
  }
  func.func @transform_2(%arg0: i32, %arg1: i32, %arg2: i32) -> (i32, i32) {
    %c0_i32 = arith.constant 0 : i32
    %c0_i32_0 = arith.constant 0 : i32
    return %c0_i32, %arg1 : i32, i32
  }
  func.func @transform_3(%arg0: i32, %arg1: i32, %arg2: i32) -> (i32, i32) {
    %c0_i32 = arith.constant 0 : i32
    return %arg0, %arg1 : i32, i32
  }
}

module attributes {stable_mosaic.version = 11 : i64} {
  func.func @_linear_kernel(%arg0: i32, %arg1: i32, %arg2: i32, %arg3: memref<16x32xf32, #tpu.memory_space<vmem>>, %arg4: memref<32x32xbf16, #tpu.memory_space<vmem>>, %arg5: memref<1x32xf32, #tpu.memory_space<vmem>>, %arg6: memref<16x32xbf16, #tpu.memory_space<vmem>>, %arg7: memref<16x32xf32, #tpu.memory_space<vmem>>) attributes {dimension_semantics = [#tpu.dimension_semantics<parallel>, #tpu.dimension_semantics<parallel>, #tpu.dimension_semantics<arbitrary>], iteration_bounds = array<i64: 1, 1, 1>, scalar_prefetch = 0 : i64, scratch_operands = 1 : i64, tpu.core_type = #tpu.core_type<tc>, window_params = [{transform_indices = @transform_0, window_bounds = array<i64: 16, 32>}, {transform_indices = @transform_1, window_bounds = array<i64: 32, 32>}, {transform_indices = @transform_2, window_bounds = array<i64: 1, 32>}, {transform_indices = @transform_3, window_bounds = array<i64: 16, 32>}]} {
    %c0_i32 = arith.constant 0 : i32
    %0 = arith.cmpi eq, %arg2, %c0_i32 : i32
    %1 = arith.extui %0 : i1 to i32
    %c0_i32_0 = arith.constant 0 : i32
    %2 = arith.cmpi ne, %1, %c0_i32_0 : i32
    scf.if %2 {
      %cst_10 = arith.constant 0.000000e+00 : f32
      %13 = vector.broadcast %cst_10 : f32 to vector<16x32xf32>
      %c0_11 = arith.constant 0 : index
      %c0_12 = arith.constant 0 : index
      %14 = vector.load %arg7[%c0_11, %c0_12] : memref<16x32xf32, #tpu.memory_space<vmem>>, vector<16x32xf32>
      tpu.vector_store %arg7[%c0_11, %c0_12], %13 {strides = array<i32>} : memref<16x32xf32, #tpu.memory_space<vmem>>, vector<16x32xf32>,
    } else {
    }
    %c0 = arith.constant 0 : index
    %c0_1 = arith.constant 0 : index
    %3 = vector.load %arg7[%c0, %c0_1] : memref<16x32xf32, #tpu.memory_space<vmem>>, vector<16x32xf32>
    %c0_2 = arith.constant 0 : index
    %c0_3 = arith.constant 0 : index
    %4 = vector.load %arg3[%c0_2, %c0_3] : memref<16x32xf32, #tpu.memory_space<vmem>>, vector<16x32xf32>
    %5 = arith.truncf %4 : vector<16x32xf32> to vector<16x32xbf16>
    %c0_4 = arith.constant 0 : index
    %c0_5 = arith.constant 0 : index
    %6 = vector.load %arg4[%c0_4, %c0_5] : memref<32x32xbf16, #tpu.memory_space<vmem>>, vector<32x32xbf16>
    %cst = arith.constant dense<0.000000e+00> : vector<16x32xf32>
    %7 = tpu.matmul %5, %6, %cst {dimension_numbers = #tpu.dot_dimension_numbers<[1], [0], [0], [1], [0, 0, 1, 1], [], []>} : vector<16x32xbf16>, vector<32x32xbf16>, vector<16x32xf32> -> vector<16x32xf32>
    %8 = arith.addf %3, %7 : vector<16x32xf32>
    %c0_6 = arith.constant 0 : index
    %c0_7 = arith.constant 0 : index
    %9 = vector.load %arg7[%c0_6, %c0_7] : memref<16x32xf32, #tpu.memory_space<vmem>>, vector<16x32xf32>
    tpu.vector_store %arg7[%c0_6, %c0_7], %8 {strides = array<i32>} : memref<16x32xf32, #tpu.memory_space<vmem>>, vector<16x32xf32>,
    %c0_i32_8 = arith.constant 0 : i32
    %10 = arith.cmpi eq, %arg2, %c0_i32_8 : i32
    %11 = arith.extui %10 : i1 to i32
    %c0_i32_9 = arith.constant 0 : i32
    %12 = arith.cmpi ne, %11, %c0_i32_9 : i32
    scf.if %12 {
      %c0_10 = arith.constant 0 : index
      %c0_11 = arith.constant 0 : index
      %13 = vector.load %arg7[%c0_10, %c0_11] : memref<16x32xf32, #tpu.memory_space<vmem>>, vector<16x32xf32>
      %c0_12 = arith.constant 0 : index
      %c0_13 = arith.constant 0 : index
      %14 = vector.load %arg5[%c0_12, %c0_13] : memref<1x32xf32, #tpu.memory_space<vmem>>, vector<1x32xf32>
      %15 = vector.broadcast %14 : vector<1x32xf32> to vector<16x32xf32>
      %16 = arith.addf %13, %15 : vector<16x32xf32>
      %17 = arith.truncf %16 : vector<16x32xf32> to vector<16x32xbf16>
      %c0_14 = arith.constant 0 : index
      %c0_15 = arith.constant 0 : index
      %18 = vector.load %arg6[%c0_14, %c0_15] : memref<16x32xbf16, #tpu.memory_space<vmem>>, vector<16x32xbf16>
      tpu.vector_store %arg6[%c0_14, %c0_15], %17 {strides = array<i32>} : memref<16x32xbf16, #tpu.memory_space<vmem>>, vector<16x32xbf16>,
    } else {
    }
    return
  }
  func.func @transform_0(%arg0: i32, %arg1: i32, %arg2: i32) -> (i32, i32) {
    %c0_i32 = arith.constant 0 : i32
    return %arg0, %arg2 : i32, i32
  }
  func.func @transform_1(%arg0: i32, %arg1: i32, %arg2: i32) -> (i32, i32) {
    %c0_i32 = arith.constant 0 : i32
    return %arg2, %arg1 : i32, i32
  }
  func.func @transform_2(%arg0: i32, %arg1: i32, %arg2: i32) -> (i32, i32) {
    %c0_i32 = arith.constant 0 : i32
    %c0_i32_0 = arith.constant 0 : i32
    return %c0_i32, %arg1 : i32, i32
  }
  func.func @transform_3(%arg0: i32, %arg1: i32, %arg2: i32) -> (i32, i32) {
    %c0_i32 = arith.constant 0 : i32
    return %arg0, %arg1 : i32, i32
  }
}

</mosaic_0001>

<llo_original>
// kernel: multihead_attn.5
$region0: #{multihead_attn.5}
  #allocation0 [shape = 'u32[]', space=smem, size = 0x4, offset = 0x4, fixed_abs, tag = 'smem constant byte address 0x4 - core index']
  #allocation1 [shape = 'u32[144,128]{1,0:T(1,128)}', space=vmem, size = 0x12000, scoped, tag = 'internal scratch']
  #allocation2 [shape = 'f32[16,32]{1,0:T(8,128)}', space=vmem, size = 0x2000, scoped, tag = 'scratch operand']
  %s0 = inlined_call_operand.vmem [shape: f32[16,32], index: 0, kind: input, shape index: {}]
  %s1 = inlined_call_operand.vmem [shape: bf16[32,32], index: 1, kind: input, shape index: {}]
  %s2 = inlined_call_operand.vmem [shape: f32[1,32], index: 2, kind: input, shape index: {}]
  %s3 = inlined_call_operand.hbm [shape: bf16[16,32], index: 3, kind: output, shape index: {}]
  %s4 = sld [smem:[#allocation0]]
  $region30: #{multihead_attn.5} parent=0
    _
  %s6 = ssub.s32 1, %s4
  %s7 = scalar_select 0, %s6, %s4
  $region1: #{multihead_attn.5} parent=0
    #allocation3 [shape = 'u8[4096]{0}', space=vmem, size = 0x1000, scoped, tag = 'output window, operand 0, single buffered']
    #allocation4 [shape = 's32[1]{0}', space=sflag, size = 0x4, scoped, tag = 'scoped memory for multihead_attn.5']
    %8 = vsyncpa [#allocation4], 0
    // Predicated region
    $region2: #{multihead_attn.5} parent=1 // pred_check
      _
    $region3: #{multihead_attn.5} parent=1 // pred_check_branch
      %10 = sbr.rel (0) target = $region5
    $region4: #{multihead_attn.5} parent=1 // pred_region
      _
    $region5: #{multihead_attn.5} parent=1 // pred_fallthru
      _
    // Predicated region
    $region6: #{multihead_attn.5} parent=1 // pred_check
      _
    $region7: #{multihead_attn.5} parent=1 // pred_check_branch
      %12 = sbr.rel (0) target = $region9
    $region8: #{multihead_attn.5} parent=1 // pred_region
      _
    $region9: #{multihead_attn.5} parent=1 // pred_fallthru
      _
    // Predicated region
    $region10: #{multihead_attn.5} parent=1 // pred_check
      _
    $region11: #{multihead_attn.5} parent=1 // pred_check_branch
      %14 = sbr.rel (0) target = $region13
    $region12: #{multihead_attn.5} parent=1 // pred_region
      _
    $region13: #{multihead_attn.5} parent=1 // pred_fallthru
      _
    %p16 = scmp.eq.s32.totalorder 0, 0
    // Predicated region
    $region14: #{multihead_attn.5} parent=1 // pred_check
      %p17 = pneg %p16
    $region15: #{multihead_attn.5} parent=1 // pred_check_branch
      %19 = sbr.rel (%p17) target = $region17
    $region16: #{multihead_attn.5} parent=1 // pred_region
      %vm20 = vcmask 261120
      %21 = vst.msk [vmem:[#allocation2] sm:$0xff] %vm20, 0.0
      %22 = vst.msk [vmem:[#allocation2 + $0x8] sm:$0xff] %vm20, 0.0
    $region17: #{multihead_attn.5} parent=1 // pred_fallthru
      _
    %v23 = vld [vmem:[#allocation2] sm:$0xff]
    %v24 = vld [vmem:[#allocation2 + $0x8] sm:$0xff]
    %v25 = vld [vmem:[%s0] sm:$0xff]
    %v26 = vld [vmem:[%s0 + $0x8] sm:$0xff]
    %v27 = vpack.c.bf16 %v26, %v25
    %v28 = vld [vmem:[%s1] sm:$0xf]
    %v29 = vld [vmem:[%s1 + $0x4] sm:$0xf]
    %v30 = vld [vmem:[%s1 + $0x8] sm:$0xf]
    %v31 = vld [vmem:[%s1 + $0xc] sm:$0xf]
    %v36 = vunpack.c.l.b16 %v28
    %v37 = vunpack.c.l.b16 %v29
    %v38 = vunpack.c.l.b16 %v30
    %v39 = vunpack.c.l.b16 %v31
    %v40 = vpack.c.b16 %v37, %v36
    %v41 = vpack.c.b16 %v39, %v38
    %vm44 = vcmask 261120
    %v46 = vsel %vm44, %v27, 0
    %48 = vmatprep.subr.bf16.mxu0 0
    %49 = vmatpush1.bf16.msra.mxu0 %v40
    %50 = vmatprep.subr.bf16.mxu0 0
    %51 = vmatpush1.bf16.msra.mxu0 %v41
    %52 = vmatprep.subr.bf16.mxu0 0
    %53 = vmatpush1.bf16.msra.mxu0 0
    %54 = vmatprep.subr.bf16.mxu0 0
    %55 = vmatpush1.bf16.msra.mxu0 0
    %56 = vmatprep.subr.bf16.mxu0 0
    %57 = vmatpush1.bf16.msra.mxu0 0
    %58 = vmatprep.subr.bf16.mxu0 0
    %59 = vmatpush1.bf16.msra.mxu0 0
    %60 = vmatprep.subr.bf16.mxu0 0
    %61 = vmatpush1.bf16.msra.mxu0 0
    %62 = vmatprep.subr.bf16.mxu0 0
    %63 = vmatpush1.bf16.msra.mxu0 0
    %64 = vmatprep.subr.bf16.mxu0 0
    %65 = vmatpush1.bf16.msra.mxu0 0
    %66 = vmatprep.subr.bf16.mxu0 0
    %67 = vmatpush1.bf16.msra.mxu0 0
    %68 = vmatprep.subr.bf16.mxu0 0
    %69 = vmatpush1.bf16.msra.mxu0 0
    %70 = vmatprep.subr.bf16.mxu0 0
    %71 = vmatpush1.bf16.msra.mxu0 0
    %72 = vmatprep.subr.bf16.mxu0 0
    %73 = vmatpush1.bf16.msra.mxu0 0
    %74 = vmatprep.subr.bf16.mxu0 0
    %75 = vmatpush1.bf16.msra.mxu0 0
    %76 = vmatprep.subr.bf16.mxu0 0
    %77 = vmatpush1.bf16.msra.mxu0 0
    %78 = vmatprep.subr.bf16.mxu0 0
    %79 = vmatpush1.bf16.msra.mxu0 0
    %80 = vmatprep.mubr.bf16.mxu0 0
    %81 = vmatmul.mubr.bf16.gmra.mrb[0].mxu0 %v46
    %v82 = vpop.f32.mrb[0].mxu0
    %v83 = vadd.f32 0.0, %v82
    %v84 = vpop.f32.mrb[0].mxu0
    %v85 = vpop.f32.mrb[0].mxu0
    %v86 = vadd.f32 0.0, %v85
    %v87 = vpop.f32.mrb[0].mxu0
    %88 = vdwg.mxu0
    %v89 = vadd.f32 %v23, %v83
    %v90 = vadd.f32 %v24, %v86
    %91 = vst.msk [vmem:[#allocation2] sm:$0xff] %vm44, %v89
    %92 = vst.msk [vmem:[#allocation2 + $0x8] sm:$0xff] %vm44, %v90
    // Predicated region
    $region18: #{multihead_attn.5} parent=1 // pred_check
      %p93 = pneg %p16
    $region19: #{multihead_attn.5} parent=1 // pred_check_branch
      %95 = sbr.rel (%p93) target = $region21
    $region20: #{multihead_attn.5} parent=1 // pred_region
      %v96 = vld [vmem:[#allocation2] sm:$0xff]
      %v97 = vld [vmem:[#allocation2 + $0x8] sm:$0xff]
      %v98 = vld [vmem:[%s2] sm:$0x1]
      %v100 = vlaneseq
      %v101 = vshrl.u32 %v100, 7
      %v102 = vsub.s32 0, %v101
      %v103 = vrot.slane %v98, %v102
      %v105 = vadd.f32 %v96, %v103
      %v106 = vadd.f32 %v97, %v103
      %v107 = vpack.c.bf16 %v106, %v105
      %v109 = vunpack.c.l.b16 %v107
      %v110 = vunpack.c.h.b16 %v107
      %v111 = vpack.c.b16 %v109, %v109
      %v112 = vpack.c.b16 %v110, %v110
      %vm115 = vcmask 257024
      %116 = vst.msk [vmem:[#allocation3] sm:$0xf] %vm115, %v111
      %117 = vst.msk [vmem:[#allocation3 + $0x4] sm:$0xf] %vm115, %v112
    $region21: #{multihead_attn.5} parent=1 // pred_fallthru
      _
    // Predicated region
    $region22: #{multihead_attn.5} parent=1 // pred_check
      _
    $region23: #{multihead_attn.5} parent=1 // pred_check_branch
      %119 = sbr.rel (0) target = $region25
    $region24: #{multihead_attn.5} parent=1 // pred_region
      %s121 = ssub.s32 128, 128
      %122 = vsyncadd [#allocation4], %s121
      %s123 = sshll.u32 [#allocation3], 4
      %s124 = int_to_ptr.vmem [resolvable:$true] %s123
      %129 = dma.vmem_to_hbm [thread:$0]  %s124, 128, %s3, [#allocation4], 64, 64, 4
    $region25: #{multihead_attn.5} parent=1 // pred_fallthru
      _
    // Predicated region
    $region26: #{multihead_attn.5} parent=1 // pred_check
      _
    $region27: #{multihead_attn.5} parent=1 // pred_check_branch
      %131 = sbr.rel (0) target = $region29
    $region28: #{multihead_attn.5} parent=1 // pred_region
      %132 = dma.done [#allocation4], 128
    $region29: #{multihead_attn.5} parent=1 // pred_fallthru
      _
    %133 = vsyncpa [#allocation4], 1

// kernel: multihead_attn.9
$region0: #{multihead_attn.9}
  #allocation0 [shape = 'u32[]', space=smem, size = 0x4, offset = 0x4, fixed_abs, tag = 'smem constant byte address 0x4 - core index']
  #allocation1 [shape = 'u32[144,128]{1,0:T(1,128)}', space=vmem, size = 0x12000, scoped, tag = 'internal scratch']
  #allocation2 [shape = 'f32[16,32]{1,0:T(8,128)}', space=vmem, size = 0x2000, scoped, tag = 'scratch operand']
  %s0 = inlined_call_operand.vmem [shape: bf16[16,32], index: 0, kind: input, shape index: {}]
  %s1 = inlined_call_operand.vmem [shape: bf16[32,32], index: 1, kind: input, shape index: {}]
  %s2 = inlined_call_operand.vmem [shape: f32[1,32], index: 2, kind: input, shape index: {}]
  %s3 = inlined_call_operand.hbm [shape: f32[16,32], index: 3, kind: output, shape index: {}]
  %s4 = sld [smem:[#allocation0]]
  $region30: #{multihead_attn.9} parent=0
    _
  %s6 = ssub.s32 1, %s4
  %s7 = scalar_select 0, %s6, %s4
  $region1: #{multihead_attn.9} parent=0
    #allocation3 [shape = 'u8[8192]{0}', space=vmem, size = 0x2000, scoped, tag = 'output window, operand 0, single buffered']
    #allocation4 [shape = 's32[1]{0}', space=sflag, size = 0x4, scoped, tag = 'scoped memory for multihead_attn.9']
    %8 = vsyncpa [#allocation4], 0
    // Predicated region
    $region2: #{multihead_attn.9} parent=1 // pred_check
      _
    $region3: #{multihead_attn.9} parent=1 // pred_check_branch
      %10 = sbr.rel (0) target = $region5
    $region4: #{multihead_attn.9} parent=1 // pred_region
      _
    $region5: #{multihead_attn.9} parent=1 // pred_fallthru
      _
    // Predicated region
    $region6: #{multihead_attn.9} parent=1 // pred_check
      _
    $region7: #{multihead_attn.9} parent=1 // pred_check_branch
      %12 = sbr.rel (0) target = $region9
    $region8: #{multihead_attn.9} parent=1 // pred_region
      _
    $region9: #{multihead_attn.9} parent=1 // pred_fallthru
      _
    // Predicated region
    $region10: #{multihead_attn.9} parent=1 // pred_check
      _
    $region11: #{multihead_attn.9} parent=1 // pred_check_branch
      %14 = sbr.rel (0) target = $region13
    $region12: #{multihead_attn.9} parent=1 // pred_region
      _
    $region13: #{multihead_attn.9} parent=1 // pred_fallthru
      _
    %p16 = scmp.eq.s32.totalorder 0, 0
    // Predicated region
    $region14: #{multihead_attn.9} parent=1 // pred_check
      %p17 = pneg %p16
    $region15: #{multihead_attn.9} parent=1 // pred_check_branch
      %19 = sbr.rel (%p17) target = $region17
    $region16: #{multihead_attn.9} parent=1 // pred_region
      %vm20 = vcmask 261120
      %21 = vst.msk [vmem:[#allocation2] sm:$0xff] %vm20, 0.0
      %22 = vst.msk [vmem:[#allocation2 + $0x8] sm:$0xff] %vm20, 0.0
    $region17: #{multihead_attn.9} parent=1 // pred_fallthru
      _
    %v23 = vld [vmem:[#allocation2] sm:$0xff]
    %v24 = vld [vmem:[#allocation2 + $0x8] sm:$0xff]
    %v25 = vld [vmem:[%s0] sm:$0xf]
    %v26 = vld [vmem:[%s0 + $0x4] sm:$0xf]
    %v27 = vld [vmem:[%s1] sm:$0xf]
    %v28 = vld [vmem:[%s1 + $0x4] sm:$0xf]
    %v29 = vld [vmem:[%s1 + $0x8] sm:$0xf]
    %v30 = vld [vmem:[%s1 + $0xc] sm:$0xf]
    %v33 = vunpack.c.l.b16 %v25
    %v34 = vunpack.c.l.b16 %v26
    %v35 = vpack.c.b16 %v34, %v33
    %v40 = vunpack.c.l.b16 %v27
    %v41 = vunpack.c.l.b16 %v28
    %v42 = vunpack.c.l.b16 %v29
    %v43 = vunpack.c.l.b16 %v30
    %v44 = vpack.c.b16 %v41, %v40
    %v45 = vpack.c.b16 %v43, %v42
    %vm48 = vcmask 261120
    %v50 = vsel %vm48, %v35, 0
    %52 = vmatprep.subr.bf16.mxu0 0
    %53 = vmatpush1.bf16.msra.mxu0 %v44
    %54 = vmatprep.subr.bf16.mxu0 0
    %55 = vmatpush1.bf16.msra.mxu0 %v45
    %56 = vmatprep.subr.bf16.mxu0 0
    %57 = vmatpush1.bf16.msra.mxu0 0
    %58 = vmatprep.subr.bf16.mxu0 0
    %59 = vmatpush1.bf16.msra.mxu0 0
    %60 = vmatprep.subr.bf16.mxu0 0
    %61 = vmatpush1.bf16.msra.mxu0 0
    %62 = vmatprep.subr.bf16.mxu0 0
    %63 = vmatpush1.bf16.msra.mxu0 0
    %64 = vmatprep.subr.bf16.mxu0 0
    %65 = vmatpush1.bf16.msra.mxu0 0
    %66 = vmatprep.subr.bf16.mxu0 0
    %67 = vmatpush1.bf16.msra.mxu0 0
    %68 = vmatprep.subr.bf16.mxu0 0
    %69 = vmatpush1.bf16.msra.mxu0 0
    %70 = vmatprep.subr.bf16.mxu0 0
    %71 = vmatpush1.bf16.msra.mxu0 0
    %72 = vmatprep.subr.bf16.mxu0 0
    %73 = vmatpush1.bf16.msra.mxu0 0
    %74 = vmatprep.subr.bf16.mxu0 0
    %75 = vmatpush1.bf16.msra.mxu0 0
    %76 = vmatprep.subr.bf16.mxu0 0
    %77 = vmatpush1.bf16.msra.mxu0 0
    %78 = vmatprep.subr.bf16.mxu0 0
    %79 = vmatpush1.bf16.msra.mxu0 0
    %80 = vmatprep.subr.bf16.mxu0 0
    %81 = vmatpush1.bf16.msra.mxu0 0
    %82 = vmatprep.subr.bf16.mxu0 0
    %83 = vmatpush1.bf16.msra.mxu0 0
    %84 = vmatprep.mubr.bf16.mxu0 0
    %85 = vmatmul.mubr.bf16.gmra.mrb[0].mxu0 %v50
    %v86 = vpop.f32.mrb[0].mxu0
    %v87 = vadd.f32 0.0, %v86
    %v88 = vpop.f32.mrb[0].mxu0
    %v89 = vpop.f32.mrb[0].mxu0
    %v90 = vadd.f32 0.0, %v89
    %v91 = vpop.f32.mrb[0].mxu0
    %92 = vdwg.mxu0
    %v93 = vadd.f32 %v23, %v87
    %v94 = vadd.f32 %v24, %v90
    %95 = vst.msk [vmem:[#allocation2] sm:$0xff] %vm48, %v93
    %96 = vst.msk [vmem:[#allocation2 + $0x8] sm:$0xff] %vm48, %v94
    // Predicated region
    $region18: #{multihead_attn.9} parent=1 // pred_check
      %p97 = pneg %p16
    $region19: #{multihead_attn.9} parent=1 // pred_check_branch
      %99 = sbr.rel (%p97) target = $region21
    $region20: #{multihead_attn.9} parent=1 // pred_region
      %v100 = vld [vmem:[#allocation2] sm:$0xff]
      %v101 = vld [vmem:[#allocation2 + $0x8] sm:$0xff]
      %v102 = vld [vmem:[%s2] sm:$0x1]
      %v104 = vlaneseq
      %v105 = vshrl.u32 %v104, 7
      %v106 = vsub.s32 0, %v105
      %v107 = vrot.slane %v102, %v106
      %v109 = vadd.f32 %v100, %v107
      %v110 = vadd.f32 %v101, %v107
      %111 = vst.msk [vmem:[#allocation3] sm:$0xff] %vm48, %v109
      %112 = vst.msk [vmem:[#allocation3 + $0x8] sm:$0xff] %vm48, %v110
    $region21: #{multihead_attn.9} parent=1 // pred_fallthru
      _
    // Predicated region
    $region22: #{multihead_attn.9} parent=1 // pred_check
      _
    $region23: #{multihead_attn.9} parent=1 // pred_check_branch
      %114 = sbr.rel (0) target = $region25
    $region24: #{multihead_attn.9} parent=1 // pred_region
      %s116 = ssub.s32 256, 256
      %117 = vsyncadd [#allocation4], %s116
      %s118 = sshll.u32 [#allocation3], 4
      %s119 = int_to_ptr.vmem [resolvable:$true] %s118
      %124 = dma.vmem_to_hbm [thread:$0]  %s119, 256, %s3, [#allocation4], 128, 128, 8
    $region25: #{multihead_attn.9} parent=1 // pred_fallthru
      _
    // Predicated region
    $region26: #{multihead_attn.9} parent=1 // pred_check
      _
    $region27: #{multihead_attn.9} parent=1 // pred_check_branch
      %126 = sbr.rel (0) target = $region29
    $region28: #{multihead_attn.9} parent=1 // pred_region
      %127 = dma.done [#allocation4], 256
    $region29: #{multihead_attn.9} parent=1 // pred_fallthru
      _
    %128 = vsyncpa [#allocation4], 1

// kernel: multihead_attn.6
$region0: #{multihead_attn.6}
  #allocation0 [shape = 'u32[]', space=smem, size = 0x4, offset = 0x4, fixed_abs, tag = 'smem constant byte address 0x4 - core index']
  #allocation1 [shape = 'u32[144,128]{1,0:T(1,128)}', space=vmem, size = 0x12000, scoped, tag = 'internal scratch']
  #allocation2 [shape = 'f32[16,32]{1,0:T(8,128)}', space=vmem, size = 0x2000, scoped, tag = 'scratch operand']
  %s0 = inlined_call_operand.vmem [shape: f32[16,32], index: 0, kind: input, shape index: {}]
  %s1 = inlined_call_operand.vmem [shape: bf16[32,32], index: 1, kind: input, shape index: {}]
  %s2 = inlined_call_operand.vmem [shape: f32[1,32], index: 2, kind: input, shape index: {}]
  %s3 = inlined_call_operand.vmem [shape: bf16[16,32], index: 3, kind: output, shape index: {}]
  %s4 = sld [smem:[#allocation0]]
  $region30: #{multihead_attn.6} parent=0
    _
  %s6 = ssub.s32 1, %s4
  %s7 = scalar_select 0, %s6, %s4
  // Predicated region
  $region2: #{multihead_attn.6} parent=0 // pred_check
    _
  $region3: #{multihead_attn.6} parent=0 // pred_check_branch
    %9 = sbr.rel (0) target = $region5
  $region4: #{multihead_attn.6} parent=0 // pred_region
    _
  $region5: #{multihead_attn.6} parent=0 // pred_fallthru
    _
  // Predicated region
  $region6: #{multihead_attn.6} parent=0 // pred_check
    _
  $region7: #{multihead_attn.6} parent=0 // pred_check_branch
    %11 = sbr.rel (0) target = $region9
  $region8: #{multihead_attn.6} parent=0 // pred_region
    _
  $region9: #{multihead_attn.6} parent=0 // pred_fallthru
    _
  // Predicated region
  $region10: #{multihead_attn.6} parent=0 // pred_check
    _
  $region11: #{multihead_attn.6} parent=0 // pred_check_branch
    %13 = sbr.rel (0) target = $region13
  $region12: #{multihead_attn.6} parent=0 // pred_region
    _
  $region13: #{multihead_attn.6} parent=0 // pred_fallthru
    _
  %p15 = scmp.eq.s32.totalorder 0, 0
  // Predicated region
  $region14: #{multihead_attn.6} parent=0 // pred_check
    %p16 = pneg %p15
  $region15: #{multihead_attn.6} parent=0 // pred_check_branch
    %18 = sbr.rel (%p16) target = $region17
  $region16: #{multihead_attn.6} parent=0 // pred_region
    %vm19 = vcmask 261120
    %20 = vst.msk [vmem:[#allocation2] sm:$0xff] %vm19, 0.0
    %21 = vst.msk [vmem:[#allocation2 + $0x8] sm:$0xff] %vm19, 0.0
  $region17: #{multihead_attn.6} parent=0 // pred_fallthru
    _
  %v22 = vld [vmem:[#allocation2] sm:$0xff]
  %v23 = vld [vmem:[#allocation2 + $0x8] sm:$0xff]
  %v24 = vld [vmem:[%s0] sm:$0xff]
  %v25 = vld [vmem:[%s0 + $0x8] sm:$0xff]
  %v26 = vpack.c.bf16 %v25, %v24
  %v27 = vld [vmem:[%s1] sm:$0xf]
  %v28 = vld [vmem:[%s1 + $0x4] sm:$0xf]
  %v29 = vld [vmem:[%s1 + $0x8] sm:$0xf]
  %v30 = vld [vmem:[%s1 + $0xc] sm:$0xf]
  %v35 = vunpack.c.l.b16 %v27
  %v36 = vunpack.c.l.b16 %v28
  %v37 = vunpack.c.l.b16 %v29
  %v38 = vunpack.c.l.b16 %v30
  %v39 = vpack.c.b16 %v36, %v35
  %v40 = vpack.c.b16 %v38, %v37
  %vm43 = vcmask 261120
  %v45 = vsel %vm43, %v26, 0
  %47 = vmatprep.subr.bf16.mxu0 0
  %48 = vmatpush1.bf16.msra.mxu0 %v39
  %49 = vmatprep.subr.bf16.mxu0 0
  %50 = vmatpush1.bf16.msra.mxu0 %v40
  %51 = vmatprep.subr.bf16.mxu0 0
  %52 = vmatpush1.bf16.msra.mxu0 0
  %53 = vmatprep.subr.bf16.mxu0 0
  %54 = vmatpush1.bf16.msra.mxu0 0
  %55 = vmatprep.subr.bf16.mxu0 0
  %56 = vmatpush1.bf16.msra.mxu0 0
  %57 = vmatprep.subr.bf16.mxu0 0
  %58 = vmatpush1.bf16.msra.mxu0 0
  %59 = vmatprep.subr.bf16.mxu0 0
  %60 = vmatpush1.bf16.msra.mxu0 0
  %61 = vmatprep.subr.bf16.mxu0 0
  %62 = vmatpush1.bf16.msra.mxu0 0
  %63 = vmatprep.subr.bf16.mxu0 0
  %64 = vmatpush1.bf16.msra.mxu0 0
  %65 = vmatprep.subr.bf16.mxu0 0
  %66 = vmatpush1.bf16.msra.mxu0 0
  %67 = vmatprep.subr.bf16.mxu0 0
  %68 = vmatpush1.bf16.msra.mxu0 0
  %69 = vmatprep.subr.bf16.mxu0 0
  %70 = vmatpush1.bf16.msra.mxu0 0
  %71 = vmatprep.subr.bf16.mxu0 0
  %72 = vmatpush1.bf16.msra.mxu0 0
  %73 = vmatprep.subr.bf16.mxu0 0
  %74 = vmatpush1.bf16.msra.mxu0 0
  %75 = vmatprep.subr.bf16.mxu0 0
  %76 = vmatpush1.bf16.msra.mxu0 0
  %77 = vmatprep.subr.bf16.mxu0 0
  %78 = vmatpush1.bf16.msra.mxu0 0
  %79 = vmatprep.mubr.bf16.mxu0 0
  %80 = vmatmul.mubr.bf16.gmra.mrb[0].mxu0 %v45
  %v81 = vpop.f32.mrb[0].mxu0
  %v82 = vadd.f32 0.0, %v81
  %v83 = vpop.f32.mrb[0].mxu0
  %v84 = vpop.f32.mrb[0].mxu0
  %v85 = vadd.f32 0.0, %v84
  %v86 = vpop.f32.mrb[0].mxu0
  %87 = vdwg.mxu0
  %v88 = vadd.f32 %v22, %v82
  %v89 = vadd.f32 %v23, %v85
  %90 = vst.msk [vmem:[#allocation2] sm:$0xff] %vm43, %v88
  %91 = vst.msk [vmem:[#allocation2 + $0x8] sm:$0xff] %vm43, %v89
  // Predicated region
  $region18: #{multihead_attn.6} parent=0 // pred_check
    %p92 = pneg %p15
  $region19: #{multihead_attn.6} parent=0 // pred_check_branch
    %94 = sbr.rel (%p92) target = $region21
  $region20: #{multihead_attn.6} parent=0 // pred_region
    %v95 = vld [vmem:[#allocation2] sm:$0xff]
    %v96 = vld [vmem:[#allocation2 + $0x8] sm:$0xff]
    %v97 = vld [vmem:[%s2] sm:$0x1]
    %v99 = vlaneseq
    %v100 = vshrl.u32 %v99, 7
    %v101 = vsub.s32 0, %v100
    %v102 = vrot.slane %v97, %v101
    %v104 = vadd.f32 %v95, %v102
    %v105 = vadd.f32 %v96, %v102
    %v106 = vpack.c.bf16 %v105, %v104
    %v108 = vunpack.c.l.b16 %v106
    %v109 = vunpack.c.h.b16 %v106
    %v110 = vpack.c.b16 %v108, %v108
    %v111 = vpack.c.b16 %v109, %v109
    %vm114 = vcmask 257024
    %115 = vst.msk [vmem:[%s3] sm:$0xf] %vm114, %v110
    %116 = vst.msk [vmem:[%s3 + $0x4] sm:$0xf] %vm114, %v111
  $region21: #{multihead_attn.6} parent=0 // pred_fallthru
    _
  // Predicated region
  $region22: #{multihead_attn.6} parent=0 // pred_check
    _
  $region23: #{multihead_attn.6} parent=0 // pred_check_branch
    %118 = sbr.rel (0) target = $region25
  $region24: #{multihead_attn.6} parent=0 // pred_region
    _
  $region25: #{multihead_attn.6} parent=0 // pred_fallthru
    _
  // Predicated region
  $region26: #{multihead_attn.6} parent=0 // pred_check
    _
  $region27: #{multihead_attn.6} parent=0 // pred_check_branch
    %120 = sbr.rel (0) target = $region29
  $region28: #{multihead_attn.6} parent=0 // pred_region
    _
  $region29: #{multihead_attn.6} parent=0 // pred_fallthru
    _

// kernel: multihead_attn.8
$region0: #{multihead_attn.8}
  #allocation0 [shape = 'u32[]', space=smem, size = 0x4, offset = 0x4, fixed_abs, tag = 'smem constant byte address 0x4 - core index']
  #allocation1 [shape = 'u32[144,128]{1,0:T(1,128)}', space=vmem, size = 0x12000, scoped, tag = 'internal scratch']
  %s0 = inlined_call_operand.hbm [shape: bf16[2,8,32], index: 0, kind: input, shape index: {}]
  %s1 = inlined_call_operand.hbm [shape: bf16[2,32,8], index: 1, kind: input, shape index: {}]
  %s2 = inlined_call_operand.hbm [shape: bf16[2,8,32], index: 2, kind: input, shape index: {}]
  %s3 = inlined_call_operand.hbm [shape: f32[2,1,8], index: 3, kind: input, shape index: {}]
  %s4 = inlined_call_operand.hbm [shape: bf16[2,8,32], index: 4, kind: output, shape index: {}]
  %s5 = sld [smem:[#allocation0]]
  $region65: #{multihead_attn.8} parent=0
    _
  %s7 = ssub.s32 1, %s5
  %s8 = scalar_select 0, %s7, %s5
  $region1: #{multihead_attn.8} parent=0
    #allocation2 [shape = 'u8[4096]{0}', space=vmem, size = 0x1000, scoped, tag = 'input window, operand 0']
    #allocation3 [shape = 's32[2]{0}', space=sflag, size = 0x8, scoped, tag = 'scoped memory for multihead_attn.8']
    #allocation4 [shape = 's32[2]{0}', space=sflag, size = 0x8, scoped, tag = 'scoped memory for multihead_attn.8']
    #allocation5 [shape = 'u8[16384]{0}', space=vmem, size = 0x4000, scoped, tag = 'input window, operand 1']
    #allocation6 [shape = 's32[2]{0}', space=sflag, size = 0x8, scoped, tag = 'scoped memory for multihead_attn.8']
    #allocation7 [shape = 'u8[4096]{0}', space=vmem, size = 0x1000, scoped, tag = 'input window, operand 2']
    #allocation8 [shape = 'u8[1024]{0}', space=vmem, size = 0x400, scoped, tag = 'input window, operand 3']
    #allocation9 [shape = 's32[2]{0}', space=sflag, size = 0x8, scoped, tag = 'scoped memory for multihead_attn.8']
    #allocation10 [shape = 'u8[4096]{0}', space=vmem, size = 0x1000, scoped, tag = 'output window, operand 0']
    %9 = vsyncpa [#allocation3], 0
    %s10 = scalar_lea.sflag [#allocation3], 1
    %11 = vsyncpa %s10, 0
    %12 = vsyncpa [#allocation6], 0
    %s13 = scalar_lea.sflag [#allocation6], 1
    %14 = vsyncpa %s13, 0
    %15 = vsyncpa [#allocation9], 0
    %s16 = scalar_lea.sflag [#allocation9], 1
    %17 = vsyncpa %s16, 0
    %18 = vsyncpa [#allocation4], 0
    %s19 = scalar_lea.sflag [#allocation4], 1
    %20 = vsyncpa %s19, 0
    loop: start=0, step=1, limit=4
    $region2: #{multihead_attn.8} parent=1 // loop_pre_header
      _
    $region3: #{multihead_attn.8} parent=1 // loop_header
      %s22 = sphi 0, %s26
      %p23 = scmp.ge.s32.totalorder %s22, 4
      %s29 = sphi 0, %s41
      %s30 = sphi 0, %s37
      %s31 = sphi 0, %s29
      %s32 = sphi 0, %s30
      %s33 = sphi 0, %s31
      %s34 = sphi 0, %s32
      %s46 = sphi 0, %s48
      %s49 = sphi 0, %s46
      %s50 = sphi 0, %s49
      %s66 = sphi 0, %s50
      %s72 = sphi 0, %s74
      %s75 = sphi 0, %s72
      %s76 = sphi 0, %s75
      %s92 = sphi 0, %s76
      %s98 = sphi 0, %s100
      %s101 = sphi 0, %s98
      %s102 = sphi 0, %s101
      %s118 = sphi 0, %s102
      %s124 = sphi 0, %s126
      %s127 = sphi 0, %s124
      %s128 = sphi 0, %s127
      %s144 = sphi 0, %s128
      %s152 = sphi 0, %s154
      %s155 = sphi 0, %s152
      %s156 = sphi 0, %s155
      %s172 = sphi 0, %s156
    $region4: #{multihead_attn.8} parent=1 // loop_header_branch
      %25 = sbr.rel (%p23) target = $region8
    $region5: #{multihead_attn.8} parent=1 // loop_body
      %s27 = ssub.s32 %s22, 1
      %s28 = ssub.s32 %s22, 2
      %s35 = sadd.s32 1, %s30
      %p36 = scmp.ge.s32.totalorder %s35, 1
      %s37 = scalar_select %p36, 0, %s35
      %s38 = sadd.s32 1, %s29
      %s39 = scalar_select %p36, %s38, %s29
      %p40 = scmp.ge.s32.totalorder %s39, 2
      %s41 = scalar_select %p40, 0, %s39
      %s42 = ssub.s32 %s29, %s41
      %s43 = ssub.s32 %s30, %s37
      %s44 = sor.u32 %s42, %s43
      %p45 = scmp.eq.s32.totalorder %s44, 0
      %s47 = sadd.s32 %s46, 1
      %s48 = scalar_select %p45, %s46, %s47
      %p51 = pneg %p45
      %p52 = scmp.eq.s32.totalorder %s22, 1
      %p53 = por %p51, %p52
      %p54 = scmp.ne.s32.totalorder %s46, %s49
      %p55 = scmp.eq.s32.totalorder %s22, 0
      %p56 = por %p54, %p55
      %p57 = scmp.ne.s32.totalorder %s46, %s49
      %p58 = scmp.eq.s32.totalorder %s27, 1
      %p59 = por %p57, %p58
      %p60 = scmp.ne.s32.totalorder %s49, %s50
      %p61 = scmp.eq.s32.totalorder %s27, 0
      %p62 = por %p60, %p61
      %p63 = scmp.ne.s32.totalorder %s49, %s50
      %p64 = scmp.eq.s32.totalorder %s28, 1
      %p65 = por %p63, %p64
      %p67 = scmp.ne.s32.totalorder %s50, %s66
      %p68 = scmp.eq.s32.totalorder %s28, 0
      %p69 = por %p67, %p68
      %s70 = ssub.s32 %s29, %s41
      %p71 = scmp.eq.s32.totalorder %s70, 0
      %s73 = sadd.s32 %s72, 1
      %s74 = scalar_select %p71, %s72, %s73
      %p77 = pneg %p71
      %p78 = scmp.eq.s32.totalorder %s22, 1
      %p79 = por %p77, %p78
      %p80 = scmp.ne.s32.totalorder %s72, %s75
      %p81 = scmp.eq.s32.totalorder %s22, 0
      %p82 = por %p80, %p81
      %p83 = scmp.ne.s32.totalorder %s72, %s75
      %p84 = scmp.eq.s32.totalorder %s27, 1
      %p85 = por %p83, %p84
      %p86 = scmp.ne.s32.totalorder %s75, %s76
      %p87 = scmp.eq.s32.totalorder %s27, 0
      %p88 = por %p86, %p87
      %p89 = scmp.ne.s32.totalorder %s75, %s76
      %p90 = scmp.eq.s32.totalorder %s28, 1
      %p91 = por %p89, %p90
      %p93 = scmp.ne.s32.totalorder %s76, %s92
      %p94 = scmp.eq.s32.totalorder %s28, 0
      %p95 = por %p93, %p94
      %s96 = ssub.s32 %s29, %s41
      %p97 = scmp.eq.s32.totalorder %s96, 0
      %s99 = sadd.s32 %s98, 1
      %s100 = scalar_select %p97, %s98, %s99
      %p103 = pneg %p97
      %p104 = scmp.eq.s32.totalorder %s22, 1
      %p105 = por %p103, %p104
      %p106 = scmp.ne.s32.totalorder %s98, %s101
      %p107 = scmp.eq.s32.totalorder %s22, 0
      %p108 = por %p106, %p107
      %p109 = scmp.ne.s32.totalorder %s98, %s101
      %p110 = scmp.eq.s32.totalorder %s27, 1
      %p111 = por %p109, %p110
      %p112 = scmp.ne.s32.totalorder %s101, %s102
      %p113 = scmp.eq.s32.totalorder %s27, 0
      %p114 = por %p112, %p113
      %p115 = scmp.ne.s32.totalorder %s101, %s102
      %p116 = scmp.eq.s32.totalorder %s28, 1
      %p117 = por %p115, %p116
      %p119 = scmp.ne.s32.totalorder %s102, %s118
      %p120 = scmp.eq.s32.totalorder %s28, 0
      %p121 = por %p119, %p120
      %s122 = ssub.s32 %s29, %s41
      %p123 = scmp.eq.s32.totalorder %s122, 0
      %s125 = sadd.s32 %s124, 1
      %s126 = scalar_select %p123, %s124, %s125
      %p129 = pneg %p123
      %p130 = scmp.eq.s32.totalorder %s22, 1
      %p131 = por %p129, %p130
      %p132 = scmp.ne.s32.totalorder %s124, %s127
      %p133 = scmp.eq.s32.totalorder %s22, 0
      %p134 = por %p132, %p133
      %p135 = scmp.ne.s32.totalorder %s124, %s127
      %p136 = scmp.eq.s32.totalorder %s27, 1
      %p137 = por %p135, %p136
      %p138 = scmp.ne.s32.totalorder %s127, %s128
      %p139 = scmp.eq.s32.totalorder %s27, 0
      %p140 = por %p138, %p139
      %p141 = scmp.ne.s32.totalorder %s127, %s128
      %p142 = scmp.eq.s32.totalorder %s28, 1
      %p143 = por %p141, %p142
      %p145 = scmp.ne.s32.totalorder %s128, %s144
      %p146 = scmp.eq.s32.totalorder %s28, 0
      %p147 = por %p145, %p146
      %s148 = ssub.s32 %s29, %s41
      %s149 = ssub.s32 %s30, %s37
      %s150 = sor.u32 %s148, %s149
      %p151 = scmp.eq.s32.totalorder %s150, 0
      %s153 = sadd.s32 %s152, 1
      %s154 = scalar_select %p151, %s152, %s153
      %p157 = pneg %p151
      %p158 = scmp.eq.s32.totalorder %s22, 1
      %p159 = por %p157, %p158
      %p160 = scmp.ne.s32.totalorder %s152, %s155
      %p161 = scmp.eq.s32.totalorder %s22, 0
      %p162 = por %p160, %p161
      %p163 = scmp.ne.s32.totalorder %s152, %s155
      %p164 = scmp.eq.s32.totalorder %s27, 1
      %p165 = por %p163, %p164
      %p166 = scmp.ne.s32.totalorder %s155, %s156
      %p167 = scmp.eq.s32.totalorder %s27, 0
      %p168 = por %p166, %p167
      %p169 = scmp.ne.s32.totalorder %s155, %s156
      %p170 = scmp.eq.s32.totalorder %s28, 1
      %p171 = por %p169, %p170
      %p173 = scmp.ne.s32.totalorder %s156, %s172
      %p174 = scmp.eq.s32.totalorder %s28, 0
      %p175 = por %p173, %p174
      %p176 = scmp.le.s32.totalorder 1, %s22
      %p177 = scmp.lt.s32.totalorder %s22, 3
      %p178 = pnand %p176, %p177
      %p179 = pneg %p178
      // Predicated region
      $region9: #{multihead_attn.8} parent=5 // pred_check
        _
      $region10: #{multihead_attn.8} parent=5 // pred_check_branch
        %181 = sbr.rel (%p178) target = $region12
      $region11: #{multihead_attn.8} parent=5 // pred_region
        %s182 = ssub.s32 %s22, 1
      $region12: #{multihead_attn.8} parent=5 // pred_fallthru
        _
      %p183 = scmp.lt.s32.totalorder %s22, 2
      // Predicated region
      $region13: #{multihead_attn.8} parent=5 // pred_check
        %p184 = pneg %p183
      $region14: #{multihead_attn.8} parent=5 // pred_check_branch
        %186 = sbr.rel (%p184) target = $region16
      $region15: #{multihead_attn.8} parent=5 // pred_region
        // Predicated region
        $region17: #{multihead_attn.8} parent=15 // pred_check
          %p187 = pneg %p56
        $region18: #{multihead_attn.8} parent=15 // pred_check_branch
          %189 = sbr.rel (%p187) target = $region20
        $region19: #{multihead_attn.8} parent=15 // pred_region
          %s190 = sand.u32 %s46, 1
          %s191 = scalar_lea.sflag [#allocation3], %s190
          %s192 = sand.u32 %s46, 1
          %s193 = smul.addr %s192, 4
          %s194 = scalar_lea.vmem [#allocation2], %s193
          %s196 = ssub.s32 64, 64
          %197 = vsyncadd %s191, %s196
          %s198 = sadd.s32 %s30, %s29
          %s199 = smul.addr %s198, 64
          %s200 = scalar_lea.hbm %s0, %s199
          %s202 = sshll.u32 %s194, 4
          %s203 = int_to_ptr.vmem [resolvable:$true] %s202
          %205 = dma.hbm_to_vmem [thread:$0]  %s200, 64, %s203, %s191
        $region20: #{multihead_attn.8} parent=15 // pred_fallthru
          _
        // Predicated region
        $region21: #{multihead_attn.8} parent=15 // pred_check
          %p206 = pneg %p82
        $region22: #{multihead_attn.8} parent=15 // pred_check_branch
          %208 = sbr.rel (%p206) target = $region24
        $region23: #{multihead_attn.8} parent=15 // pred_region
          %s209 = sand.u32 %s22, 1
          %s210 = scalar_lea.sflag [#allocation6], %s209
          %s211 = sand.u32 %s72, 1
          %s212 = smul.addr %s211, 16
          %s213 = scalar_lea.vmem [#allocation5], %s212
          %s215 = ssub.s32 256, 256
          %216 = vsyncadd %s210, %s215
          %s217 = smul.addr %s29, 4
          %s218 = smul.addr %s217, 64
          %s219 = scalar_lea.hbm %s1, %s218
          %s220 = sshll.u32 %s213, 4
          %s221 = int_to_ptr.vmem [resolvable:$true] %s220
          %226 = dma.hbm_to_vmem [thread:$0]  %s219, 256, %s221, %s210, 64, 64, 4
        $region24: #{multihead_attn.8} parent=15 // pred_fallthru
          _
        // Predicated region
        $region25: #{multihead_attn.8} parent=15 // pred_check
          %p227 = pneg %p108
        $region26: #{multihead_attn.8} parent=15 // pred_check_branch
          %229 = sbr.rel (%p227) target = $region28
        $region27: #{multihead_attn.8} parent=15 // pred_region
          %s230 = sand.u32 %s22, 1
          %s231 = scalar_lea.sflag [#allocation6], %s230
          %s232 = sand.u32 %s98, 1
          %s233 = smul.addr %s232, 4
          %s234 = scalar_lea.vmem [#allocation7], %s233
          %s236 = ssub.s32 64, 64
          %237 = vsyncadd %s231, %s236
          %s238 = smul.addr %s29, 64
          %s239 = scalar_lea.hbm %s2, %s238
          %s241 = sshll.u32 %s234, 4
          %s242 = int_to_ptr.vmem [resolvable:$true] %s241
          %244 = dma.hbm_to_vmem [thread:$0]  %s239, 64, %s242, %s231
        $region28: #{multihead_attn.8} parent=15 // pred_fallthru
          _
        // Predicated region
        $region29: #{multihead_attn.8} parent=15 // pred_check
          %p245 = pneg %p134
        $region30: #{multihead_attn.8} parent=15 // pred_check_branch
          %247 = sbr.rel (%p245) target = $region32
        $region31: #{multihead_attn.8} parent=15 // pred_region
          %s248 = sand.u32 %s124, 1
          %s249 = scalar_lea.sflag [#allocation9], %s248
          %s250 = sand.u32 %s124, 1
          %s251 = scalar_lea.vmem [#allocation8], %s250
          %s253 = ssub.s32 16, 16
          %254 = vsyncadd %s249, %s253
          %s255 = smul.addr %s29, 16
          %s256 = scalar_lea.hbm %s3, %s255
          %s258 = sshll.u32 %s251, 4
          %s259 = int_to_ptr.vmem [resolvable:$true] %s258
          %261 = dma.hbm_to_vmem [thread:$0]  %s256, 16, %s259, %s249
        $region32: #{multihead_attn.8} parent=15 // pred_fallthru
          _
      $region16: #{multihead_attn.8} parent=5 // pred_fallthru
        _
      %p262 = scmp.le.s32.totalorder 1, %s22
      %p263 = scmp.lt.s32.totalorder %s22, 3
      %p264 = pnand %p262, %p263
      %p265 = pneg %p264
      // Predicated region
      $region33: #{multihead_attn.8} parent=5 // pred_check
        _
      $region34: #{multihead_attn.8} parent=5 // pred_check_branch
        %267 = sbr.rel (%p264) target = $region36
      $region35: #{multihead_attn.8} parent=5 // pred_region
        %s268 = ssub.s32 %s22, 1
        %s269 = sand.u32 %s49, 1
        %s270 = scalar_lea.sflag [#allocation3], %s269
        %s271 = sand.u32 %s49, 1
        %s272 = smul.addr %s271, 4
        %s273 = scalar_lea.vmem [#allocation2], %s272
        // Predicated region
        $region37: #{multihead_attn.8} parent=35 // pred_check
          %p274 = pneg %p62
        $region38: #{multihead_attn.8} parent=35 // pred_check_branch
          %276 = sbr.rel (%p274) target = $region40
        $region39: #{multihead_attn.8} parent=35 // pred_region
          %277 = dma.done %s270, 64
        $region40: #{multihead_attn.8} parent=35 // pred_fallthru
          _
        %s278 = sand.u32 %s27, 1
        %s279 = scalar_lea.sflag [#allocation6], %s278
        %s280 = sand.u32 %s75, 1
        %s281 = smul.addr %s280, 16
        %s282 = scalar_lea.vmem [#allocation5], %s281
        // Predicated region
        $region41: #{multihead_attn.8} parent=35 // pred_check
          %p283 = pneg %p88
        $region42: #{multihead_attn.8} parent=35 // pred_check_branch
          %285 = sbr.rel (%p283) target = $region44
        $region43: #{multihead_attn.8} parent=35 // pred_region
          %286 = dma.done %s279, 256
        $region44: #{multihead_attn.8} parent=35 // pred_fallthru
          _
        %s287 = sand.u32 %s27, 1
        %s288 = scalar_lea.sflag [#allocation6], %s287
        %s289 = sand.u32 %s101, 1
        %s290 = smul.addr %s289, 4
        %s291 = scalar_lea.vmem [#allocation7], %s290
        // Predicated region
        $region45: #{multihead_attn.8} parent=35 // pred_check
          %p292 = pneg %p114
        $region46: #{multihead_attn.8} parent=35 // pred_check_branch
          %294 = sbr.rel (%p292) target = $region48
        $region47: #{multihead_attn.8} parent=35 // pred_region
          %295 = dma.done %s288, 64
        $region48: #{multihead_attn.8} parent=35 // pred_fallthru
          _
        %s296 = sand.u32 %s127, 1
        %s297 = scalar_lea.sflag [#allocation9], %s296
        %s298 = sand.u32 %s127, 1
        %s299 = scalar_lea.vmem [#allocation8], %s298
        // Predicated region
        $region49: #{multihead_attn.8} parent=35 // pred_check
          %p300 = pneg %p140
        $region50: #{multihead_attn.8} parent=35 // pred_check_branch
          %302 = sbr.rel (%p300) target = $region52
        $region51: #{multihead_attn.8} parent=35 // pred_region
          %303 = dma.done %s297, 16
        $region52: #{multihead_attn.8} parent=35 // pred_fallthru
          _
        %s304 = sand.u32 %s49, 1
        %s305 = scalar_lea.sflag [#allocation3], %s304
        %s306 = sand.u32 %s49, 1
        %s307 = smul.addr %s306, 4
        %s308 = scalar_lea.vmem [#allocation2], %s307
        %p309 = pneg %p62
        %p310 = pneg %p59
        %s311 = sand.u32 %s27, 1
        %s312 = scalar_lea.sflag [#allocation6], %s311
        %s313 = sand.u32 %s75, 1
        %s314 = smul.addr %s313, 16
        %s315 = scalar_lea.vmem [#allocation5], %s314
        %p316 = pneg %p88
        %p317 = pneg %p85
        %s318 = sand.u32 %s27, 1
        %s319 = scalar_lea.sflag [#allocation6], %s318
        %s320 = sand.u32 %s101, 1
        %s321 = smul.addr %s320, 4
        %s322 = scalar_lea.vmem [#allocation7], %s321
        %p323 = pneg %p114
        %p324 = pneg %p111
        %s325 = sand.u32 %s127, 1
        %s326 = scalar_lea.sflag [#allocation9], %s325
        %s327 = sand.u32 %s127, 1
        %s328 = scalar_lea.vmem [#allocation8], %s327
        %p329 = pneg %p140
        %p330 = pneg %p137
        %p331 = pneg %p168
        %p332 = pneg %p165
        %s333 = sand.u32 %s155, 1
        %s334 = scalar_lea.sflag [#allocation4], %s333
        %s335 = sand.u32 %s155, 1
        %s336 = smul.addr %s335, 4
        %s337 = scalar_lea.vmem [#allocation10], %s336
        %v339 = vld [vmem:[%s299] sm:$0x1]
        %v340 = vld [vmem:[%s273] sm:$0xf]
        %v341 = vld [vmem:[%s282] sm:$0xf]
        %v342 = vld [vmem:[%s291] sm:$0xf]
        %v344 = vlaneseq
        %v345 = vshrl.u32 %v344, 7
        %v346 = vsub.s32 0, %v345
        %v347 = vrot.slane %v339, %v346
        %vm349 = vcmask 64512
        %v351 = vsel %vm349, %v340, 0
        %vm353 = vcmask 1043456
        %v355 = vsel %vm353, %v341, 0
        %357 = vmatprep.subr.bf16.mxu0 0
        %358 = vmatpush1.bf16.msra.mxu0 %v355
        %359 = vmatprep.subr.bf16.mxu0 0
        %360 = vmatpush1.bf16.msra.mxu0 0
        %361 = vmatprep.subr.bf16.mxu0 0
        %362 = vmatpush1.bf16.msra.mxu0 0
        %363 = vmatprep.subr.bf16.mxu0 0
        %364 = vmatpush1.bf16.msra.mxu0 0
        %365 = vmatprep.subr.bf16.mxu0 0
        %366 = vmatpush1.bf16.msra.mxu0 0
        %367 = vmatprep.subr.bf16.mxu0 0
        %368 = vmatpush1.bf16.msra.mxu0 0
        %369 = vmatprep.subr.bf16.mxu0 0
        %370 = vmatpush1.bf16.msra.mxu0 0
        %371 = vmatprep.subr.bf16.mxu0 0
        %372 = vmatpush1.bf16.msra.mxu0 0
        %373 = vmatprep.subr.bf16.mxu0 0
        %374 = vmatpush1.bf16.msra.mxu0 0
        %375 = vmatprep.subr.bf16.mxu0 0
        %376 = vmatpush1.bf16.msra.mxu0 0
        %377 = vmatprep.subr.bf16.mxu0 0
        %378 = vmatpush1.bf16.msra.mxu0 0
        %379 = vmatprep.subr.bf16.mxu0 0
        %380 = vmatpush1.bf16.msra.mxu0 0
        %381 = vmatprep.subr.bf16.mxu0 0
        %382 = vmatpush1.bf16.msra.mxu0 0
        %383 = vmatprep.subr.bf16.mxu0 0
        %384 = vmatpush1.bf16.msra.mxu0 0
        %385 = vmatprep.subr.bf16.mxu0 0
        %386 = vmatpush1.bf16.msra.mxu0 0
        %387 = vmatprep.subr.bf16.mxu0 0
        %388 = vmatpush1.bf16.msra.mxu0 0
        %389 = vmatprep.mubr.bf16.mxu0 0
        %390 = vmatmul.mubr.bf16.gmra.mrb[0].mxu0 %v351
        %v391 = vpop.f32.mrb[0].mxu0
        %v392 = vadd.f32 %v347, %v391
        %v393 = vpop.f32.mrb[0].mxu0
        %v394 = vpop.f32.mrb[0].mxu0
        %v395 = vpop.f32.mrb[0].mxu0
        %396 = vdwg.mxu0
        %v397 = vsel %vm349, %v392, -inf
        %398 = vmax.xlane.f32.xlu0 %v397
        %v399 = vpop.xlane.xlu0 %398
        %v400 = vsub.f32 %v392, %v399
        %v401 = vmul.f32 %v400, 1.442695
        %v402 = vpow.pop %v401
        %v403 = vsel %vm349, %v402, 0.0
        %404 = vadd.xlane.f32.xlu0 %v403
        %v405 = vpop.xlane.xlu0 %404
        %v406 = vpack.c.bf16 %v402, %v402
        %v408 = vsel %vm349, %v406, 0
        %v411 = vsel %vm353, %v342, 0
        %413 = vmatprep.subr.bf16.mxu0 0
        %414 = vmatpush1.bf16.msra.mxu0 %v411
        %415 = vmatprep.subr.bf16.mxu0 0
        %416 = vmatpush1.bf16.msra.mxu0 0
        %417 = vmatprep.subr.bf16.mxu0 0
        %418 = vmatpush1.bf16.msra.mxu0 0
        %419 = vmatprep.subr.bf16.mxu0 0
        %420 = vmatpush1.bf16.msra.mxu0 0
        %421 = vmatprep.subr.bf16.mxu0 0
        %422 = vmatpush1.bf16.msra.mxu0 0
        %423 = vmatprep.subr.bf16.mxu0 0
        %424 = vmatpush1.bf16.msra.mxu0 0
        %425 = vmatprep.subr.bf16.mxu0 0
        %426 = vmatpush1.bf16.msra.mxu0 0
        %427 = vmatprep.subr.bf16.mxu0 0
        %428 = vmatpush1.bf16.msra.mxu0 0
        %429 = vmatprep.subr.bf16.mxu0 0
        %430 = vmatpush1.bf16.msra.mxu0 0
        %431 = vmatprep.subr.bf16.mxu0 0
        %432 = vmatpush1.bf16.msra.mxu0 0
        %433 = vmatprep.subr.bf16.mxu0 0
        %434 = vmatpush1.bf16.msra.mxu0 0
        %435 = vmatprep.subr.bf16.mxu0 0
        %436 = vmatpush1.bf16.msra.mxu0 0
        %437 = vmatprep.subr.bf16.mxu0 0
        %438 = vmatpush1.bf16.msra.mxu0 0
        %439 = vmatprep.subr.bf16.mxu0 0
        %440 = vmatpush1.bf16.msra.mxu0 0
        %441 = vmatprep.subr.bf16.mxu0 0
        %442 = vmatpush1.bf16.msra.mxu0 0
        %443 = vmatprep.subr.bf16.mxu0 0
        %444 = vmatpush1.bf16.msra.mxu0 0
        %445 = vmatprep.mubr.bf16.mxu0 0
        %446 = vmatmul.mubr.bf16.gmra.mrb[0].mxu0 %v408
        %v447 = vpop.f32.mrb[0].mxu0
        %v448 = vadd.f32 0.0, %v447
        %v449 = vpop.f32.mrb[0].mxu0
        %v450 = vpop.f32.mrb[0].mxu0
        %v451 = vpop.f32.mrb[0].mxu0
        %452 = vdwg.mxu0
        %v453 = vrcp.pop %v405
        %v454 = vmul.f32 %v448, %v453
        %v455 = vpack.c.bf16 %v454, %v454
        %vm456 = vcmask 60416
        %457 = vst.msk [vmem:[%s337] sm:$0xf] %vm456, %v455
        %v458 = vld [vmem:[%s273] sm:$0xf]
        %v459 = vld [vmem:[%s282 + $0x4] sm:$0xf]
        %v460 = vld [vmem:[%s291] sm:$0xf]
        %v462 = vunpack.c.l.b16 %v458
        %v463 = vpack.c.b16 %v462, %v462
        %464 = vrot.lane.b32.xlu0 %v463, 120
        %v465 = vpop.permute.xlu0 %464
        %v467 = vsel %vm349, %v465, 0
        %v470 = vsel %vm353, %v459, 0
        %472 = vmatprep.subr.bf16.mxu0 0
        %473 = vmatpush1.bf16.msra.mxu0 %v470
        %474 = vmatprep.subr.bf16.mxu0 0
        %475 = vmatpush1.bf16.msra.mxu0 0
        %476 = vmatprep.subr.bf16.mxu0 0
        %477 = vmatpush1.bf16.msra.mxu0 0
        %478 = vmatprep.subr.bf16.mxu0 0
        %479 = vmatpush1.bf16.msra.mxu0 0
        %480 = vmatprep.subr.bf16.mxu0 0
        %481 = vmatpush1.bf16.msra.mxu0 0
        %482 = vmatprep.subr.bf16.mxu0 0
        %483 = vmatpush1.bf16.msra.mxu0 0
        %484 = vmatprep.subr.bf16.mxu0 0
        %485 = vmatpush1.bf16.msra.mxu0 0
        %486 = vmatprep.subr.bf16.mxu0 0
        %487 = vmatpush1.bf16.msra.mxu0 0
        %488 = vmatprep.subr.bf16.mxu0 0
        %489 = vmatpush1.bf16.msra.mxu0 0
        %490 = vmatprep.subr.bf16.mxu0 0
        %491 = vmatpush1.bf16.msra.mxu0 0
        %492 = vmatprep.subr.bf16.mxu0 0
        %493 = vmatpush1.bf16.msra.mxu0 0
        %494 = vmatprep.subr.bf16.mxu0 0
        %495 = vmatpush1.bf16.msra.mxu0 0
        %496 = vmatprep.subr.bf16.mxu0 0
        %497 = vmatpush1.bf16.msra.mxu0 0
        %498 = vmatprep.subr.bf16.mxu0 0
        %499 = vmatpush1.bf16.msra.mxu0 0
        %500 = vmatprep.subr.bf16.mxu0 0
        %501 = vmatpush1.bf16.msra.mxu0 0
        %502 = vmatprep.subr.bf16.mxu0 0
        %503 = vmatpush1.bf16.msra.mxu0 0
        %504 = vmatprep.mubr.bf16.mxu0 0
        %505 = vmatmul.mubr.bf16.gmra.mrb[0].mxu0 %v467
        %v506 = vpop.f32.mrb[0].mxu0
        %v507 = vadd.f32 %v347, %v506
        %v508 = vpop.f32.mrb[0].mxu0
        %v509 = vpop.f32.mrb[0].mxu0
        %v510 = vpop.f32.mrb[0].mxu0
        %511 = vdwg.mxu0
        %v512 = vsel %vm349, %v507, -inf
        %513 = vmax.xlane.f32.xlu0 %v512
        %v514 = vpop.xlane.xlu0 %513
        %v515 = vsub.f32 %v507, %v514
        %v516 = vmul.f32 %v515, 1.442695
        %v517 = vpow.pop %v516
        %v518 = vsel %vm349, %v517, 0.0
        %519 = vadd.xlane.f32.xlu0 %v518
        %v520 = vpop.xlane.xlu0 %519
        %v521 = vpack.c.bf16 %v517, %v517
        %v523 = vunpack.c.l.b16 %v460
        %v524 = vpack.c.b16 %v523, %v523
        %525 = vrot.lane.b32.xlu0 %v524, 120
        %v526 = vpop.permute.xlu0 %525
        %v528 = vsel %vm349, %v521, 0
        %v531 = vsel %vm353, %v526, 0
        %533 = vmatprep.subr.bf16.mxu0 0
        %534 = vmatpush1.bf16.msra.mxu0 %v531
        %535 = vmatprep.subr.bf16.mxu0 0
        %536 = vmatpush1.bf16.msra.mxu0 0
        %537 = vmatprep.subr.bf16.mxu0 0
        %538 = vmatpush1.bf16.msra.mxu0 0
        %539 = vmatprep.subr.bf16.mxu0 0
        %540 = vmatpush1.bf16.msra.mxu0 0
        %541 = vmatprep.subr.bf16.mxu0 0
        %542 = vmatpush1.bf16.msra.mxu0 0
        %543 = vmatprep.subr.bf16.mxu0 0
        %544 = vmatpush1.bf16.msra.mxu0 0
        %545 = vmatprep.subr.bf16.mxu0 0
        %546 = vmatpush1.bf16.msra.mxu0 0
        %547 = vmatprep.subr.bf16.mxu0 0
        %548 = vmatpush1.bf16.msra.mxu0 0
        %549 = vmatprep.subr.bf16.mxu0 0
        %550 = vmatpush1.bf16.msra.mxu0 0
        %551 = vmatprep.subr.bf16.mxu0 0
        %552 = vmatpush1.bf16.msra.mxu0 0
        %553 = vmatprep.subr.bf16.mxu0 0
        %554 = vmatpush1.bf16.msra.mxu0 0
        %555 = vmatprep.subr.bf16.mxu0 0
        %556 = vmatpush1.bf16.msra.mxu0 0
        %557 = vmatprep.subr.bf16.mxu0 0
        %558 = vmatpush1.bf16.msra.mxu0 0
        %559 = vmatprep.subr.bf16.mxu0 0
        %560 = vmatpush1.bf16.msra.mxu0 0
        %561 = vmatprep.subr.bf16.mxu0 0
        %562 = vmatpush1.bf16.msra.mxu0 0
        %563 = vmatprep.subr.bf16.mxu0 0
        %564 = vmatpush1.bf16.msra.mxu0 0
        %565 = vmatprep.mubr.bf16.mxu0 0
        %566 = vmatmul.mubr.bf16.gmra.mrb[0].mxu0 %v528
        %v567 = vpop.f32.mrb[0].mxu0
        %v568 = vadd.f32 0.0, %v567
        %v569 = vpop.f32.mrb[0].mxu0
        %v570 = vpop.f32.mrb[0].mxu0
        %v571 = vpop.f32.mrb[0].mxu0
        %572 = vdwg.mxu0
        %v573 = vrcp.pop %v520
        %v574 = vmul.f32 %v568, %v573
        %v575 = vpack.c.bf16 %v574, %v574
        %v577 = vunpack.c.l.b16 %v575
        %v578 = vpack.c.b16 %v577, %v577
        %579 = vrot.lane.b32.xlu0 %v578, 8
        %v580 = vpop.permute.xlu0 %579
        %vm582 = vcmask 126016
        %583 = vst.msk [vmem:[%s337] sm:$0xf] %vm582, %v580
        %v584 = vld [vmem:[%s273] sm:$0xf]
        %v585 = vld [vmem:[%s282 + $0x8] sm:$0xf]
        %v586 = vld [vmem:[%s291] sm:$0xf]
        %v588 = vunpack.c.l.b16 %v584
        %v589 = vpack.c.b16 %v588, %v588
        %590 = vrot.lane.b32.xlu0 %v589, 112
        %v591 = vpop.permute.xlu0 %590
        %v593 = vsel %vm349, %v591, 0
        %v596 = vsel %vm353, %v585, 0
        %598 = vmatprep.subr.bf16.mxu0 0
        %599 = vmatpush1.bf16.msra.mxu0 %v596
        %600 = vmatprep.subr.bf16.mxu0 0
        %601 = vmatpush1.bf16.msra.mxu0 0
        %602 = vmatprep.subr.bf16.mxu0 0
        %603 = vmatpush1.bf16.msra.mxu0 0
        %604 = vmatprep.subr.bf16.mxu0 0
        %605 = vmatpush1.bf16.msra.mxu0 0
        %606 = vmatprep.subr.bf16.mxu0 0
        %607 = vmatpush1.bf16.msra.mxu0 0
        %608 = vmatprep.subr.bf16.mxu0 0
        %609 = vmatpush1.bf16.msra.mxu0 0
        %610 = vmatprep.subr.bf16.mxu0 0
        %611 = vmatpush1.bf16.msra.mxu0 0
        %612 = vmatprep.subr.bf16.mxu0 0
        %613 = vmatpush1.bf16.msra.mxu0 0
        %614 = vmatprep.subr.bf16.mxu0 0
        %615 = vmatpush1.bf16.msra.mxu0 0
        %616 = vmatprep.subr.bf16.mxu0 0
        %617 = vmatpush1.bf16.msra.mxu0 0
        %618 = vmatprep.subr.bf16.mxu0 0
        %619 = vmatpush1.bf16.msra.mxu0 0
        %620 = vmatprep.subr.bf16.mxu0 0
        %621 = vmatpush1.bf16.msra.mxu0 0
        %622 = vmatprep.subr.bf16.mxu0 0
        %623 = vmatpush1.bf16.msra.mxu0 0
        %624 = vmatprep.subr.bf16.mxu0 0
        %625 = vmatpush1.bf16.msra.mxu0 0
        %626 = vmatprep.subr.bf16.mxu0 0
        %627 = vmatpush1.bf16.msra.mxu0 0
        %628 = vmatprep.subr.bf16.mxu0 0
        %629 = vmatpush1.bf16.msra.mxu0 0
        %630 = vmatprep.mubr.bf16.mxu0 0
        %631 = vmatmul.mubr.bf16.gmra.mrb[0].mxu0 %v593
        %v632 = vpop.f32.mrb[0].mxu0
        %v633 = vadd.f32 %v347, %v632
        %v634 = vpop.f32.mrb[0].mxu0
        %v635 = vpop.f32.mrb[0].mxu0
        %v636 = vpop.f32.mrb[0].mxu0
        %637 = vdwg.mxu0
        %v638 = vsel %vm349, %v633, -inf
        %639 = vmax.xlane.f32.xlu0 %v638
        %v640 = vpop.xlane.xlu0 %639
        %v641 = vsub.f32 %v633, %v640
        %v642 = vmul.f32 %v641, 1.442695
        %v643 = vpow.pop %v642
        %v644 = vsel %vm349, %v643, 0.0
        %645 = vadd.xlane.f32.xlu0 %v644
        %v646 = vpop.xlane.xlu0 %645
        %v647 = vpack.c.bf16 %v643, %v643
        %v649 = vunpack.c.l.b16 %v586
        %v650 = vpack.c.b16 %v649, %v649
        %651 = vrot.lane.b32.xlu0 %v650, 112
        %v652 = vpop.permute.xlu0 %651
        %v654 = vsel %vm349, %v647, 0
        %v657 = vsel %vm353, %v652, 0
        %659 = vmatprep.subr.bf16.mxu0 0
        %660 = vmatpush1.bf16.msra.mxu0 %v657
        %661 = vmatprep.subr.bf16.mxu0 0
        %662 = vmatpush1.bf16.msra.mxu0 0
        %663 = vmatprep.subr.bf16.mxu0 0
        %664 = vmatpush1.bf16.msra.mxu0 0
        %665 = vmatprep.subr.bf16.mxu0 0
        %666 = vmatpush1.bf16.msra.mxu0 0
        %667 = vmatprep.subr.bf16.mxu0 0
        %668 = vmatpush1.bf16.msra.mxu0 0
        %669 = vmatprep.subr.bf16.mxu0 0
        %670 = vmatpush1.bf16.msra.mxu0 0
        %671 = vmatprep.subr.bf16.mxu0 0
        %672 = vmatpush1.bf16.msra.mxu0 0
        %673 = vmatprep.subr.bf16.mxu0 0
        %674 = vmatpush1.bf16.msra.mxu0 0
        %675 = vmatprep.subr.bf16.mxu0 0
        %676 = vmatpush1.bf16.msra.mxu0 0
        %677 = vmatprep.subr.bf16.mxu0 0
        %678 = vmatpush1.bf16.msra.mxu0 0
        %679 = vmatprep.subr.bf16.mxu0 0
        %680 = vmatpush1.bf16.msra.mxu0 0
        %681 = vmatprep.subr.bf16.mxu0 0
        %682 = vmatpush1.bf16.msra.mxu0 0
        %683 = vmatprep.subr.bf16.mxu0 0
        %684 = vmatpush1.bf16.msra.mxu0 0
        %685 = vmatprep.subr.bf16.mxu0 0
        %686 = vmatpush1.bf16.msra.mxu0 0
        %687 = vmatprep.subr.bf16.mxu0 0
        %688 = vmatpush1.bf16.msra.mxu0 0
        %689 = vmatprep.subr.bf16.mxu0 0
        %690 = vmatpush1.bf16.msra.mxu0 0
        %691 = vmatprep.mubr.bf16.mxu0 0
        %692 = vmatmul.mubr.bf16.gmra.mrb[0].mxu0 %v654
        %v693 = vpop.f32.mrb[0].mxu0
        %v694 = vadd.f32 0.0, %v693
        %v695 = vpop.f32.mrb[0].mxu0
        %v696 = vpop.f32.mrb[0].mxu0
        %v697 = vpop.f32.mrb[0].mxu0
        %698 = vdwg.mxu0
        %v699 = vrcp.pop %v646
        %v700 = vmul.f32 %v694, %v699
        %v701 = vpack.c.bf16 %v700, %v700
        %v703 = vunpack.c.l.b16 %v701
        %v704 = vpack.c.b16 %v703, %v703
        %705 = vrot.lane.b32.xlu0 %v704, 16
        %v706 = vpop.permute.xlu0 %705
        %vm708 = vcmask 191616
        %709 = vst.msk [vmem:[%s337] sm:$0xf] %vm708, %v706
        %v710 = vld [vmem:[%s273] sm:$0xf]
        %v711 = vld [vmem:[%s282 + $0xc] sm:$0xf]
        %v712 = vld [vmem:[%s291] sm:$0xf]
        %v714 = vunpack.c.l.b16 %v710
        %v715 = vpack.c.b16 %v714, %v714
        %716 = vrot.lane.b32.xlu0 %v715, 104
        %v717 = vpop.permute.xlu0 %716
        %v719 = vsel %vm349, %v717, 0
        %v722 = vsel %vm353, %v711, 0
        %724 = vmatprep.subr.bf16.mxu0 0
        %725 = vmatpush1.bf16.msra.mxu0 %v722
        %726 = vmatprep.subr.bf16.mxu0 0
        %727 = vmatpush1.bf16.msra.mxu0 0
        %728 = vmatprep.subr.bf16.mxu0 0
        %729 = vmatpush1.bf16.msra.mxu0 0
        %730 = vmatprep.subr.bf16.mxu0 0
        %731 = vmatpush1.bf16.msra.mxu0 0
        %732 = vmatprep.subr.bf16.mxu0 0
        %733 = vmatpush1.bf16.msra.mxu0 0
        %734 = vmatprep.subr.bf16.mxu0 0
        %735 = vmatpush1.bf16.msra.mxu0 0
        %736 = vmatprep.subr.bf16.mxu0 0
        %737 = vmatpush1.bf16.msra.mxu0 0
        %738 = vmatprep.subr.bf16.mxu0 0
        %739 = vmatpush1.bf16.msra.mxu0 0
        %740 = vmatprep.subr.bf16.mxu0 0
        %741 = vmatpush1.bf16.msra.mxu0 0
        %742 = vmatprep.subr.bf16.mxu0 0
        %743 = vmatpush1.bf16.msra.mxu0 0
        %744 = vmatprep.subr.bf16.mxu0 0
        %745 = vmatpush1.bf16.msra.mxu0 0
        %746 = vmatprep.subr.bf16.mxu0 0
        %747 = vmatpush1.bf16.msra.mxu0 0
        %748 = vmatprep.subr.bf16.mxu0 0
        %749 = vmatpush1.bf16.msra.mxu0 0
        %750 = vmatprep.subr.bf16.mxu0 0
        %751 = vmatpush1.bf16.msra.mxu0 0
        %752 = vmatprep.subr.bf16.mxu0 0
        %753 = vmatpush1.bf16.msra.mxu0 0
        %754 = vmatprep.subr.bf16.mxu0 0
        %755 = vmatpush1.bf16.msra.mxu0 0
        %756 = vmatprep.mubr.bf16.mxu0 0
        %757 = vmatmul.mubr.bf16.gmra.mrb[0].mxu0 %v719
        %v758 = vpop.f32.mrb[0].mxu0
        %v759 = vadd.f32 %v347, %v758
        %v760 = vpop.f32.mrb[0].mxu0
        %v761 = vpop.f32.mrb[0].mxu0
        %v762 = vpop.f32.mrb[0].mxu0
        %763 = vdwg.mxu0
        %v764 = vsel %vm349, %v759, -inf
        %765 = vmax.xlane.f32.xlu0 %v764
        %v766 = vpop.xlane.xlu0 %765
        %v767 = vsub.f32 %v759, %v766
        %v768 = vmul.f32 %v767, 1.442695
        %v769 = vpow.pop %v768
        %v770 = vsel %vm349, %v769, 0.0
        %771 = vadd.xlane.f32.xlu0 %v770
        %v772 = vpop.xlane.xlu0 %771
        %v773 = vpack.c.bf16 %v769, %v769
        %v775 = vunpack.c.l.b16 %v712
        %v776 = vpack.c.b16 %v775, %v775
        %777 = vrot.lane.b32.xlu0 %v776, 104
        %v778 = vpop.permute.xlu0 %777
        %v780 = vsel %vm349, %v773, 0
        %v783 = vsel %vm353, %v778, 0
        %785 = vmatprep.subr.bf16.mxu0 0
        %786 = vmatpush1.bf16.msra.mxu0 %v783
        %787 = vmatprep.subr.bf16.mxu0 0
        %788 = vmatpush1.bf16.msra.mxu0 0
        %789 = vmatprep.subr.bf16.mxu0 0
        %790 = vmatpush1.bf16.msra.mxu0 0
        %791 = vmatprep.subr.bf16.mxu0 0
        %792 = vmatpush1.bf16.msra.mxu0 0
        %793 = vmatprep.subr.bf16.mxu0 0
        %794 = vmatpush1.bf16.msra.mxu0 0
        %795 = vmatprep.subr.bf16.mxu0 0
        %796 = vmatpush1.bf16.msra.mxu0 0
        %797 = vmatprep.subr.bf16.mxu0 0
        %798 = vmatpush1.bf16.msra.mxu0 0
        %799 = vmatprep.subr.bf16.mxu0 0
        %800 = vmatpush1.bf16.msra.mxu0 0
        %801 = vmatprep.subr.bf16.mxu0 0
        %802 = vmatpush1.bf16.msra.mxu0 0
        %803 = vmatprep.subr.bf16.mxu0 0
        %804 = vmatpush1.bf16.msra.mxu0 0
        %805 = vmatprep.subr.bf16.mxu0 0
        %806 = vmatpush1.bf16.msra.mxu0 0
        %807 = vmatprep.subr.bf16.mxu0 0
        %808 = vmatpush1.bf16.msra.mxu0 0
        %809 = vmatprep.subr.bf16.mxu0 0
        %810 = vmatpush1.bf16.msra.mxu0 0
        %811 = vmatprep.subr.bf16.mxu0 0
        %812 = vmatpush1.bf16.msra.mxu0 0
        %813 = vmatprep.subr.bf16.mxu0 0
        %814 = vmatpush1.bf16.msra.mxu0 0
        %815 = vmatprep.subr.bf16.mxu0 0
        %816 = vmatpush1.bf16.msra.mxu0 0
        %817 = vmatprep.mubr.bf16.mxu0 0
        %818 = vmatmul.mubr.bf16.gmra.mrb[0].mxu0 %v780
        %v819 = vpop.f32.mrb[0].mxu0
        %v820 = vadd.f32 0.0, %v819
        %v821 = vpop.f32.mrb[0].mxu0
        %v822 = vpop.f32.mrb[0].mxu0
        %v823 = vpop.f32.mrb[0].mxu0
        %824 = vdwg.mxu0
        %v825 = vrcp.pop %v772
        %v826 = vmul.f32 %v820, %v825
        %v827 = vpack.c.bf16 %v826, %v826
        %v829 = vunpack.c.l.b16 %v827
        %v830 = vpack.c.b16 %v829, %v829
        %831 = vrot.lane.b32.xlu0 %v830, 24
        %v832 = vpop.permute.xlu0 %831
        %vm834 = vcmask 257216
        %835 = vst.msk [vmem:[%s337] sm:$0xf] %vm834, %v832
        %s836 = sand.u32 %s155, 1
        %s837 = scalar_lea.sflag [#allocation4], %s836
        %s838 = sand.u32 %s155, 1
        %s839 = smul.addr %s838, 4
        %s840 = scalar_lea.vmem [#allocation10], %s839
        // Predicated region
        $region53: #{multihead_attn.8} parent=35 // pred_check
          %p841 = pneg %p165
        $region54: #{multihead_attn.8} parent=35 // pred_check_branch
          %843 = sbr.rel (%p841) target = $region56
        $region55: #{multihead_attn.8} parent=35 // pred_region
          %s845 = ssub.s32 64, 64
          %846 = vsyncadd %s837, %s845
          %s847 = sadd.s32 %s32, %s31
          %s848 = smul.addr %s847, 64
          %s849 = scalar_lea.hbm %s4, %s848
          %s851 = sshll.u32 %s840, 4
          %s852 = int_to_ptr.vmem [resolvable:$true] %s851
          %854 = dma.vmem_to_hbm [thread:$0]  %s852, 64, %s849, %s837
        $region56: #{multihead_attn.8} parent=35 // pred_fallthru
          _
      $region36: #{multihead_attn.8} parent=5 // pred_fallthru
        _
      %p855 = scmp.le.s32.totalorder 2, %s22
      // Predicated region
      $region57: #{multihead_attn.8} parent=5 // pred_check
        %p856 = pneg %p855
      $region58: #{multihead_attn.8} parent=5 // pred_check_branch
        %858 = sbr.rel (%p856) target = $region60
      $region59: #{multihead_attn.8} parent=5 // pred_region
        %s859 = ssub.s32 %s22, 2
        // Predicated region
        $region61: #{multihead_attn.8} parent=59 // pred_check
          %p860 = pneg %p171
        $region62: #{multihead_attn.8} parent=59 // pred_check_branch
          %862 = sbr.rel (%p860) target = $region64
        $region63: #{multihead_attn.8} parent=59 // pred_region
          %s863 = sand.u32 %s156, 1
          %s864 = scalar_lea.sflag [#allocation4], %s863
          %s865 = sand.u32 %s156, 1
          %s866 = smul.addr %s865, 4
          %s867 = scalar_lea.vmem [#allocation10], %s866
          %868 = dma.done %s864, 64
        $region64: #{multihead_attn.8} parent=59 // pred_fallthru
          _
      $region60: #{multihead_attn.8} parent=5 // pred_fallthru
        _
    $region6: #{multihead_attn.8} parent=1 // loop_footer
      %s26 = sadd.s32 1, %s22
    $region7: #{multihead_attn.8} parent=1 // loop_footer_branch
      %21 = sbr.rel target = $region3
    $region8: #{multihead_attn.8} parent=1 // loop_exit
      _
    %869 = vsyncpa [#allocation3], 1
    %s870 = scalar_lea.sflag [#allocation3], 1
    %871 = vsyncpa %s870, 1
    %872 = vsyncpa [#allocation6], 1
    %s873 = scalar_lea.sflag [#allocation6], 1
    %874 = vsyncpa %s873, 1
    %875 = vsyncpa [#allocation9], 1
    %s876 = scalar_lea.sflag [#allocation9], 1
    %877 = vsyncpa %s876, 1
    %878 = vsyncpa [#allocation4], 1
    %s879 = scalar_lea.sflag [#allocation4], 1
    %880 = vsyncpa %s879, 1

</llo_original>
